<compile_context>
chip_gen: v5e
topology: v5e:2x2
jax: 0.10.0
libtpu: 0.0.40
codegen_flags: <defaults>
</compile_context>

<pallas_src>
import functools

import jax
import jax.numpy as jnp
from jax.experimental import pallas as pl
from jax.experimental.pallas import tpu as pltpu  # noqa: F401  (TPU backend)


def _elu(x):
    # ELU with alpha=1.0 (torch.nn.ELU default)
    return jnp.where(x > 0, x, jnp.exp(jnp.minimum(x, 0.0)) - 1.0)


def regressor_kernel(x_ref, w0_ref, b0_ref, wblk_ref, vblk_ref, wf_ref, bf_ref,
                     out_ref, *, n_blocks):
    x = x_ref[...]
    # Fused input linear: columns [0:L) = mu branch, [L:2L) = var branch.
    h = jnp.dot(x, w0_ref[...], preferred_element_type=jnp.float32) + b0_ref[...]
    # model[1]: h = h + ELU(h)
    h = h + _elu(h)
    # model[2..2+n_blocks): h = h + ELU(BN(Lin(ELU(Lin(h)))))
    for k in range(n_blocks):
        t = jnp.dot(h, wblk_ref[k, 0],
                    preferred_element_type=jnp.float32) + vblk_ref[k, 0]
        t = _elu(t)
        t = jnp.dot(t, wblk_ref[k, 1],
                    preferred_element_type=jnp.float32) + vblk_ref[k, 1]
        # BatchNorm1d, training-mode: per-column batch stats, biased variance.
        mean = jnp.mean(t, axis=0, keepdims=True)
        var = jnp.mean((t - mean) ** 2, axis=0, keepdims=True)
        t = (t - mean) * jax.lax.rsqrt(var + 1e-5) * vblk_ref[k, 2] + vblk_ref[k, 3]
        t = _elu(t)
        h = h + t
    # Fused + lane-padded output linear: [0:out_mu) mu, [out_mu:out_mu+out_var) var.
    out_ref[...] = jnp.dot(h, wf_ref[...],
                           preferred_element_type=jnp.float32) + bf_ref[...]


def _full_spec(shape):
    nd = len(shape)
    return pl.BlockSpec(shape, lambda: (0,) * nd)


def _block_diag(a, b):
    """Block-diagonal combine along the last two axes (supports leading dims)."""
    z_ab = jnp.zeros(a.shape[:-1] + (b.shape[-1],), a.dtype)
    z_ba = jnp.zeros(b.shape[:-1] + (a.shape[-1],), b.dtype)
    top = jnp.concatenate([a, z_ab], axis=-1)
    bot = jnp.concatenate([z_ba, b], axis=-1)
    return jnp.concatenate([top, bot], axis=-2)


def pack_params(params):
    """Fuse mu/var branch parameters into 6 lane-fused buffers."""
    out_mu = int(params["mu_wf"].shape[1])
    out_var = int(params["var_wf"].shape[1])
    n_blocks = int(params["mu_w1"].shape[0])

    # Input linear: concatenate along lanes -> (in_dim, 2L), (1, 2L)
    w0 = jnp.concatenate([params["mu_w0"], params["var_w0"]], axis=1)
    b0 = jnp.concatenate([params["mu_b0"], params["var_b0"]], axis=1)

    # Block linears: block-diagonal (n_blocks, 2L, 2L), stacked -> (n_blocks, 2, 2L, 2L)
    w1 = _block_diag(params["mu_w1"], params["var_w1"])
    w2 = _block_diag(params["mu_w2"], params["var_w2"])
    wblk = jnp.stack([w1, w2], axis=1)

    # Per-block vectors [b1, b2, gamma, beta] -> (n_blocks, 4, 1, 2L)
    def cat_vec(name):
        return jnp.concatenate([params[f"mu_{name}"], params[f"var_{name}"]],
                               axis=-1)
    vblk = jnp.stack([cat_vec("b1"), cat_vec("b2"),
                      cat_vec("gamma"), cat_vec("beta")], axis=1)

    # Output linear: block-diagonal then zero-pad to a lane-dense width.
    out_total = out_mu + out_var
    out_pad = max(128, -(-out_total // 128) * 128)
    wf = _block_diag(params["mu_wf"], params["var_wf"])           # (2L, out_total)
    bf = jnp.concatenate([params["mu_bf"], params["var_bf"]], axis=-1)
    wf = jnp.pad(wf, ((0, 0), (0, out_pad - out_total)))
    bf = jnp.pad(bf, ((0, 0), (0, out_pad - out_total)))

    return {"w0": w0, "b0": b0, "wblk": wblk, "vblk": vblk, "wf": wf, "bf": bf,
            "out_mu": out_mu, "out_var": out_var, "n_blocks": n_blocks}


def regressor_forward(x, packed):
    B, in_dim = x.shape
    two_l = packed["w0"].shape[1]
    out_pad = packed["wf"].shape[1]
    n_blocks = packed["n_blocks"]
    out_mu, out_var = packed["out_mu"], packed["out_var"]

    args = [x, packed["w0"], packed["b0"], packed["wblk"], packed["vblk"],
            packed["wf"], packed["bf"]]
    kernel = functools.partial(regressor_kernel, n_blocks=n_blocks)

    flops = 2 * B * (in_dim * two_l + n_blocks * 2 * two_l * two_l
                     + two_l * out_pad)
    transcendentals = B * two_l * (1 + 2 * n_blocks)           # exp in ELU
    bytes_accessed = sum(int(a.size) * a.dtype.itemsize for a in args) \
        + B * out_pad * 4

    out = pl.pallas_call(
        kernel,
        out_shape=jax.ShapeDtypeStruct((B, out_pad), jnp.float32),
        in_specs=[_full_spec(a.shape) for a in args],
        out_specs=_full_spec((B, out_pad)),
        cost_estimate=pl.CostEstimate(flops=flops,
                                      transcendentals=transcendentals,
                                      bytes_accessed=bytes_accessed),
    )(*args)

    return out[:, :out_mu], out[:, out_mu:out_mu + out_var]


def init_params(key, in_dim, out_dim, latent_dim, n_blocks=5):
    """Deterministic synthetic parameters (not a checkpoint load)."""
    ks = iter(jax.random.split(key, 32))

    def w(shape, fan_in):
        bound = 1.0 / jnp.sqrt(jnp.float32(fan_in))
        return jax.random.uniform(next(ks), shape, jnp.float32, -bound, bound)

    def branch_params(final_out):
        return {
            "w0": w((in_dim, latent_dim), in_dim),
            "b0": w((1, latent_dim), in_dim),
            "w1": w((n_blocks, latent_dim, latent_dim), latent_dim),
            "b1": w((n_blocks, 1, latent_dim), latent_dim),
            "w2": w((n_blocks, latent_dim, latent_dim), latent_dim),
            "b2": w((n_blocks, 1, latent_dim), latent_dim),
            "gamma": jnp.ones((n_blocks, 1, latent_dim), jnp.float32),
            "beta": jnp.zeros((n_blocks, 1, latent_dim), jnp.float32),
            "wf": w((latent_dim, final_out), latent_dim),
            "bf": w((1, final_out), latent_dim),
        }

    mu = branch_params(out_dim)
    var = branch_params(out_dim ** 2 + 2)
    params = {f"mu_{k}": v for k, v in mu.items()}
    params.update({f"var_{k}": v for k, v in var.items()})
    return params


def _reference_branch(x, p, prefix, n_blocks):
    # Pure-JAX reference on the original (unfused) parameters.
    h = x @ p[f"{prefix}_w0"] + p[f"{prefix}_b0"]
    h = h + _elu(h)
    for k in range(n_blocks):
        t = h @ p[f"{prefix}_w1"][k] + p[f"{prefix}_b1"][k]
        t = _elu(t)
        t = t @ p[f"{prefix}_w2"][k] + p[f"{prefix}_b2"][k]
        mean = jnp.mean(t, axis=0, keepdims=True)
        var = jnp.mean((t - mean) ** 2, axis=0, keepdims=True)
        t = (t - mean) * jax.lax.rsqrt(var + 1e-5) * p[f"{prefix}_gamma"][k] \
            + p[f"{prefix}_beta"][k]
        t = _elu(t)
        h = h + t
    return h @ p[f"{prefix}_wf"] + p[f"{prefix}_bf"]


if __name__ == "__main__":
    B, in_dim, out_dim, latent_dim = 8, 16, 4, 32
    n_blocks = 5

    key = jax.random.PRNGKey(0)
    kx, kp = jax.random.split(key)
    x = jax.random.normal(kx, (B, in_dim), jnp.float32)
    params = init_params(kp, in_dim, out_dim, latent_dim, n_blocks)
    packed = pack_params(params)

    x_mu, x_var = regressor_forward(x, packed)
    jax.block_until_ready((x_mu, x_var))

    assert x_mu.shape == (B, out_dim)
    assert x_var.shape == (B, out_dim ** 2 + 2)

    ref_mu = _reference_branch(x, params, "mu", n_blocks)
    ref_var = _reference_branch(x, params, "var", n_blocks)
    assert jnp.allclose(x_mu, ref_mu, atol=1e-3, rtol=1e-3)
    assert jnp.allclose(x_var, ref_var, atol=1e-3, rtol=1e-3)

    print("KERNEL_OK")
</pallas_src>

<mosaic_0001>
module attributes {stable_mosaic.version = 11 : i64} {
  func.func @regressor_kernel(%arg0: memref<8x16xf32, #tpu.memory_space<vmem>>, %arg1: memref<16x64xf32, #tpu.memory_space<vmem>>, %arg2: memref<1x64xf32, #tpu.memory_space<vmem>>, %arg3: memref<5x2x64x64xf32, #tpu.memory_space<vmem>>, %arg4: memref<5x4x1x64xf32, #tpu.memory_space<vmem>>, %arg5: memref<64x128xf32, #tpu.memory_space<vmem>>, %arg6: memref<1x128xf32, #tpu.memory_space<vmem>>, %arg7: memref<8x128xf32, #tpu.memory_space<vmem>>) attributes {dimension_semantics = [], scalar_prefetch = 0 : i64, scratch_operands = 0 : i64, tpu.core_type = #tpu.core_type<tc>} {
    %c0 = arith.constant 0 : index
    %c0_0 = arith.constant 0 : index
    %0 = vector.load %arg0[%c0, %c0_0] : memref<8x16xf32, #tpu.memory_space<vmem>>, vector<8x16xf32>
    %c0_1 = arith.constant 0 : index
    %c0_2 = arith.constant 0 : index
    %1 = vector.load %arg1[%c0_1, %c0_2] : memref<16x64xf32, #tpu.memory_space<vmem>>, vector<16x64xf32>
    %cst = arith.constant dense<0.000000e+00> : vector<8x64xf32>
    %2 = tpu.matmul %0, %1, %cst {dimension_numbers = #tpu.dot_dimension_numbers<[1], [0], [0], [1], [0, 0, 1, 1], [], []>} : vector<8x16xf32>, vector<16x64xf32>, vector<8x64xf32> -> vector<8x64xf32>
    %c0_3 = arith.constant 0 : index
    %c0_4 = arith.constant 0 : index
    %3 = vector.load %arg2[%c0_3, %c0_4] : memref<1x64xf32, #tpu.memory_space<vmem>>, vector<1x64xf32>
    %4 = vector.broadcast %3 : vector<1x64xf32> to vector<8x64xf32>
    %5 = arith.addf %2, %4 : vector<8x64xf32>
    %cst_5 = arith.constant 0.000000e+00 : f32
    %6 = vector.broadcast %cst_5 : f32 to vector<8x64xf32>
    %7 = arith.cmpf ogt, %5, %6 : vector<8x64xf32>
    %cst_6 = arith.constant 0.000000e+00 : f32
    %8 = vector.broadcast %cst_6 : f32 to vector<8x64xf32>
    %9 = arith.minimumf %5, %8 : vector<8x64xf32>
    %10 = math.exp %9 : vector<8x64xf32>
    %cst_7 = arith.constant 1.000000e+00 : f32
    %11 = vector.broadcast %cst_7 : f32 to vector<8x64xf32>
    %12 = arith.subf %10, %11 : vector<8x64xf32>
    %13 = arith.select %7, %5, %12 : vector<8x64xi1>, vector<8x64xf32>
    %14 = arith.addf %5, %13 : vector<8x64xf32>
    %c0_8 = arith.constant 0 : index
    %c0_9 = arith.constant 0 : index
    %c0_10 = arith.constant 0 : index
    %c0_11 = arith.constant 0 : index
    %15 = vector.load %arg3[%c0_8, %c0_9, %c0_10, %c0_11] : memref<5x2x64x64xf32, #tpu.memory_space<vmem>>, vector<1x1x64x64xf32>
    %16 = vector.shape_cast %15 : vector<1x1x64x64xf32> to vector<64x64xf32>
    %cst_12 = arith.constant dense<0.000000e+00> : vector<8x64xf32>
    %17 = tpu.matmul %14, %16, %cst_12 {dimension_numbers = #tpu.dot_dimension_numbers<[1], [0], [0], [1], [0, 0, 1, 1], [], []>} : vector<8x64xf32>, vector<64x64xf32>, vector<8x64xf32> -> vector<8x64xf32>
    %c0_13 = arith.constant 0 : index
    %c0_14 = arith.constant 0 : index
    %c0_15 = arith.constant 0 : index
    %c0_16 = arith.constant 0 : index
    %18 = vector.load %arg4[%c0_13, %c0_14, %c0_15, %c0_16] : memref<5x4x1x64xf32, #tpu.memory_space<vmem>>, vector<1x1x1x64xf32>
    %19 = vector.shape_cast %18 : vector<1x1x1x64xf32> to vector<1x64xf32>
    %20 = vector.broadcast %19 : vector<1x64xf32> to vector<8x64xf32>
    %21 = arith.addf %17, %20 : vector<8x64xf32>
    %cst_17 = arith.constant 0.000000e+00 : f32
    %22 = vector.broadcast %cst_17 : f32 to vector<8x64xf32>
    %23 = arith.cmpf ogt, %21, %22 : vector<8x64xf32>
    %cst_18 = arith.constant 0.000000e+00 : f32
    %24 = vector.broadcast %cst_18 : f32 to vector<8x64xf32>
    %25 = arith.minimumf %21, %24 : vector<8x64xf32>
    %26 = math.exp %25 : vector<8x64xf32>
    %cst_19 = arith.constant 1.000000e+00 : f32
    %27 = vector.broadcast %cst_19 : f32 to vector<8x64xf32>
    %28 = arith.subf %26, %27 : vector<8x64xf32>
    %29 = arith.select %23, %21, %28 : vector<8x64xi1>, vector<8x64xf32>
    %c0_20 = arith.constant 0 : index
    %c1 = arith.constant 1 : index
    %c0_21 = arith.constant 0 : index
    %c0_22 = arith.constant 0 : index
    %30 = vector.load %arg3[%c0_20, %c1, %c0_21, %c0_22] : memref<5x2x64x64xf32, #tpu.memory_space<vmem>>, vector<1x1x64x64xf32>
    %31 = vector.shape_cast %30 : vector<1x1x64x64xf32> to vector<64x64xf32>
    %cst_23 = arith.constant dense<0.000000e+00> : vector<8x64xf32>
    %32 = tpu.matmul %29, %31, %cst_23 {dimension_numbers = #tpu.dot_dimension_numbers<[1], [0], [0], [1], [0, 0, 1, 1], [], []>} : vector<8x64xf32>, vector<64x64xf32>, vector<8x64xf32> -> vector<8x64xf32>
    %c0_24 = arith.constant 0 : index
    %c1_25 = arith.constant 1 : index
    %c0_26 = arith.constant 0 : index
    %c0_27 = arith.constant 0 : index
    %33 = vector.load %arg4[%c0_24, %c1_25, %c0_26, %c0_27] : memref<5x4x1x64xf32, #tpu.memory_space<vmem>>, vector<1x1x1x64xf32>
    %34 = vector.shape_cast %33 : vector<1x1x1x64xf32> to vector<1x64xf32>
    %35 = vector.broadcast %34 : vector<1x64xf32> to vector<8x64xf32>
    %36 = arith.addf %32, %35 : vector<8x64xf32>
    %cst_28 = arith.constant dense<0.000000e+00> : vector<64xf32>
    %37 = vector.multi_reduction <add>, %36, %cst_28 [0] : vector<8x64xf32> to vector<64xf32>
    %38 = vector.shape_cast %37 : vector<64xf32> to vector<1x64xf32>
    %cst_29 = arith.constant 8.000000e+00 : f32
    %39 = vector.broadcast %cst_29 : f32 to vector<1x64xf32>
    %40 = arith.divf %38, %39 : vector<1x64xf32>
    %41 = vector.broadcast %40 : vector<1x64xf32> to vector<8x64xf32>
    %42 = arith.subf %36, %41 : vector<8x64xf32>
    %43 = arith.mulf %42, %42 : vector<8x64xf32>
    %cst_30 = arith.constant dense<0.000000e+00> : vector<64xf32>
    %44 = vector.multi_reduction <add>, %43, %cst_30 [0] : vector<8x64xf32> to vector<64xf32>
    %45 = vector.shape_cast %44 : vector<64xf32> to vector<1x64xf32>
    %cst_31 = arith.constant 8.000000e+00 : f32
    %46 = vector.broadcast %cst_31 : f32 to vector<1x64xf32>
    %47 = arith.divf %45, %46 : vector<1x64xf32>
    %48 = vector.broadcast %40 : vector<1x64xf32> to vector<8x64xf32>
    %49 = arith.subf %36, %48 : vector<8x64xf32>
    %cst_32 = arith.constant 9.99999974E-6 : f32
    %50 = vector.broadcast %cst_32 : f32 to vector<1x64xf32>
    %51 = arith.addf %47, %50 : vector<1x64xf32>
    %52 = math.rsqrt %51 : vector<1x64xf32>
    %53 = vector.broadcast %52 : vector<1x64xf32> to vector<8x64xf32>
    %54 = arith.mulf %49, %53 : vector<8x64xf32>
    %c0_33 = arith.constant 0 : index
    %c2 = arith.constant 2 : index
    %c0_34 = arith.constant 0 : index
    %c0_35 = arith.constant 0 : index
    %55 = vector.load %arg4[%c0_33, %c2, %c0_34, %c0_35] : memref<5x4x1x64xf32, #tpu.memory_space<vmem>>, vector<1x1x1x64xf32>
    %56 = vector.shape_cast %55 : vector<1x1x1x64xf32> to vector<1x64xf32>
    %57 = vector.broadcast %56 : vector<1x64xf32> to vector<8x64xf32>
    %58 = arith.mulf %54, %57 : vector<8x64xf32>
    %c0_36 = arith.constant 0 : index
    %c3 = arith.constant 3 : index
    %c0_37 = arith.constant 0 : index
    %c0_38 = arith.constant 0 : index
    %59 = vector.load %arg4[%c0_36, %c3, %c0_37, %c0_38] : memref<5x4x1x64xf32, #tpu.memory_space<vmem>>, vector<1x1x1x64xf32>
    %60 = vector.shape_cast %59 : vector<1x1x1x64xf32> to vector<1x64xf32>
    %61 = vector.broadcast %60 : vector<1x64xf32> to vector<8x64xf32>
    %62 = arith.addf %58, %61 : vector<8x64xf32>
    %cst_39 = arith.constant 0.000000e+00 : f32
    %63 = vector.broadcast %cst_39 : f32 to vector<8x64xf32>
    %64 = arith.cmpf ogt, %62, %63 : vector<8x64xf32>
    %cst_40 = arith.constant 0.000000e+00 : f32
    %65 = vector.broadcast %cst_40 : f32 to vector<8x64xf32>
    %66 = arith.minimumf %62, %65 : vector<8x64xf32>
    %67 = math.exp %66 : vector<8x64xf32>
    %cst_41 = arith.constant 1.000000e+00 : f32
    %68 = vector.broadcast %cst_41 : f32 to vector<8x64xf32>
    %69 = arith.subf %67, %68 : vector<8x64xf32>
    %70 = arith.select %64, %62, %69 : vector<8x64xi1>, vector<8x64xf32>
    %71 = arith.addf %14, %70 : vector<8x64xf32>
    %c1_42 = arith.constant 1 : index
    %c0_43 = arith.constant 0 : index
    %c0_44 = arith.constant 0 : index
    %c0_45 = arith.constant 0 : index
    %72 = vector.load %arg3[%c1_42, %c0_43, %c0_44, %c0_45] : memref<5x2x64x64xf32, #tpu.memory_space<vmem>>, vector<1x1x64x64xf32>
    %73 = vector.shape_cast %72 : vector<1x1x64x64xf32> to vector<64x64xf32>
    %cst_46 = arith.constant dense<0.000000e+00> : vector<8x64xf32>
    %74 = tpu.matmul %71, %73, %cst_46 {dimension_numbers = #tpu.dot_dimension_numbers<[1], [0], [0], [1], [0, 0, 1, 1], [], []>} : vector<8x64xf32>, vector<64x64xf32>, vector<8x64xf32> -> vector<8x64xf32>
    %c1_47 = arith.constant 1 : index
    %c0_48 = arith.constant 0 : index
    %c0_49 = arith.constant 0 : index
    %c0_50 = arith.constant 0 : index
    %75 = vector.load %arg4[%c1_47, %c0_48, %c0_49, %c0_50] : memref<5x4x1x64xf32, #tpu.memory_space<vmem>>, vector<1x1x1x64xf32>
    %76 = vector.shape_cast %75 : vector<1x1x1x64xf32> to vector<1x64xf32>
    %77 = vector.broadcast %76 : vector<1x64xf32> to vector<8x64xf32>
    %78 = arith.addf %74, %77 : vector<8x64xf32>
    %cst_51 = arith.constant 0.000000e+00 : f32
    %79 = vector.broadcast %cst_51 : f32 to vector<8x64xf32>
    %80 = arith.cmpf ogt, %78, %79 : vector<8x64xf32>
    %cst_52 = arith.constant 0.000000e+00 : f32
    %81 = vector.broadcast %cst_52 : f32 to vector<8x64xf32>
    %82 = arith.minimumf %78, %81 : vector<8x64xf32>
    %83 = math.exp %82 : vector<8x64xf32>
    %cst_53 = arith.constant 1.000000e+00 : f32
    %84 = vector.broadcast %cst_53 : f32 to vector<8x64xf32>
    %85 = arith.subf %83, %84 : vector<8x64xf32>
    %86 = arith.select %80, %78, %85 : vector<8x64xi1>, vector<8x64xf32>
    %c1_54 = arith.constant 1 : index
    %c1_55 = arith.constant 1 : index
    %c0_56 = arith.constant 0 : index
    %c0_57 = arith.constant 0 : index
    %87 = vector.load %arg3[%c1_54, %c1_55, %c0_56, %c0_57] : memref<5x2x64x64xf32, #tpu.memory_space<vmem>>, vector<1x1x64x64xf32>
    %88 = vector.shape_cast %87 : vector<1x1x64x64xf32> to vector<64x64xf32>
    %cst_58 = arith.constant dense<0.000000e+00> : vector<8x64xf32>
    %89 = tpu.matmul %86, %88, %cst_58 {dimension_numbers = #tpu.dot_dimension_numbers<[1], [0], [0], [1], [0, 0, 1, 1], [], []>} : vector<8x64xf32>, vector<64x64xf32>, vector<8x64xf32> -> vector<8x64xf32>
    %c1_59 = arith.constant 1 : index
    %c1_60 = arith.constant 1 : index
    %c0_61 = arith.constant 0 : index
    %c0_62 = arith.constant 0 : index
    %90 = vector.load %arg4[%c1_59, %c1_60, %c0_61, %c0_62] : memref<5x4x1x64xf32, #tpu.memory_space<vmem>>, vector<1x1x1x64xf32>
    %91 = vector.shape_cast %90 : vector<1x1x1x64xf32> to vector<1x64xf32>
    %92 = vector.broadcast %91 : vector<1x64xf32> to vector<8x64xf32>
    %93 = arith.addf %89, %92 : vector<8x64xf32>
    %cst_63 = arith.constant dense<0.000000e+00> : vector<64xf32>
    %94 = vector.multi_reduction <add>, %93, %cst_63 [0] : vector<8x64xf32> to vector<64xf32>
    %95 = vector.shape_cast %94 : vector<64xf32> to vector<1x64xf32>
    %cst_64 = arith.constant 8.000000e+00 : f32
    %96 = vector.broadcast %cst_64 : f32 to vector<1x64xf32>
    %97 = arith.divf %95, %96 : vector<1x64xf32>
    %98 = vector.broadcast %97 : vector<1x64xf32> to vector<8x64xf32>
    %99 = arith.subf %93, %98 : vector<8x64xf32>
    %100 = arith.mulf %99, %99 : vector<8x64xf32>
    %cst_65 = arith.constant dense<0.000000e+00> : vector<64xf32>
    %101 = vector.multi_reduction <add>, %100, %cst_65 [0] : vector<8x64xf32> to vector<64xf32>
    %102 = vector.shape_cast %101 : vector<64xf32> to vector<1x64xf32>
    %cst_66 = arith.constant 8.000000e+00 : f32
    %103 = vector.broadcast %cst_66 : f32 to vector<1x64xf32>
    %104 = arith.divf %102, %103 : vector<1x64xf32>
    %105 = vector.broadcast %97 : vector<1x64xf32> to vector<8x64xf32>
    %106 = arith.subf %93, %105 : vector<8x64xf32>
    %cst_67 = arith.constant 9.99999974E-6 : f32
    %107 = vector.broadcast %cst_67 : f32 to vector<1x64xf32>
    %108 = arith.addf %104, %107 : vector<1x64xf32>
    %109 = math.rsqrt %108 : vector<1x64xf32>
    %110 = vector.broadcast %109 : vector<1x64xf32> to vector<8x64xf32>
    %111 = arith.mulf %106, %110 : vector<8x64xf32>
    %c1_68 = arith.constant 1 : index
    %c2_69 = arith.constant 2 : index
    %c0_70 = arith.constant 0 : index
    %c0_71 = arith.constant 0 : index
    %112 = vector.load %arg4[%c1_68, %c2_69, %c0_70, %c0_71] : memref<5x4x1x64xf32, #tpu.memory_space<vmem>>, vector<1x1x1x64xf32>
    %113 = vector.shape_cast %112 : vector<1x1x1x64xf32> to vector<1x64xf32>
    %114 = vector.broadcast %113 : vector<1x64xf32> to vector<8x64xf32>
    %115 = arith.mulf %111, %114 : vector<8x64xf32>
    %c1_72 = arith.constant 1 : index
    %c3_73 = arith.constant 3 : index
    %c0_74 = arith.constant 0 : index
    %c0_75 = arith.constant 0 : index
    %116 = vector.load %arg4[%c1_72, %c3_73, %c0_74, %c0_75] : memref<5x4x1x64xf32, #tpu.memory_space<vmem>>, vector<1x1x1x64xf32>
    %117 = vector.shape_cast %116 : vector<1x1x1x64xf32> to vector<1x64xf32>
    %118 = vector.broadcast %117 : vector<1x64xf32> to vector<8x64xf32>
    %119 = arith.addf %115, %118 : vector<8x64xf32>
    %cst_76 = arith.constant 0.000000e+00 : f32
    %120 = vector.broadcast %cst_76 : f32 to vector<8x64xf32>
    %121 = arith.cmpf ogt, %119, %120 : vector<8x64xf32>
    %cst_77 = arith.constant 0.000000e+00 : f32
    %122 = vector.broadcast %cst_77 : f32 to vector<8x64xf32>
    %123 = arith.minimumf %119, %122 : vector<8x64xf32>
    %124 = math.exp %123 : vector<8x64xf32>
    %cst_78 = arith.constant 1.000000e+00 : f32
    %125 = vector.broadcast %cst_78 : f32 to vector<8x64xf32>
    %126 = arith.subf %124, %125 : vector<8x64xf32>
    %127 = arith.select %121, %119, %126 : vector<8x64xi1>, vector<8x64xf32>
    %128 = arith.addf %71, %127 : vector<8x64xf32>
    %c2_79 = arith.constant 2 : index
    %c0_80 = arith.constant 0 : index
    %c0_81 = arith.constant 0 : index
    %c0_82 = arith.constant 0 : index
    %129 = vector.load %arg3[%c2_79, %c0_80, %c0_81, %c0_82] : memref<5x2x64x64xf32, #tpu.memory_space<vmem>>, vector<1x1x64x64xf32>
    %130 = vector.shape_cast %129 : vector<1x1x64x64xf32> to vector<64x64xf32>
    %cst_83 = arith.constant dense<0.000000e+00> : vector<8x64xf32>
    %131 = tpu.matmul %128, %130, %cst_83 {dimension_numbers = #tpu.dot_dimension_numbers<[1], [0], [0], [1], [0, 0, 1, 1], [], []>} : vector<8x64xf32>, vector<64x64xf32>, vector<8x64xf32> -> vector<8x64xf32>
    %c2_84 = arith.constant 2 : index
    %c0_85 = arith.constant 0 : index
    %c0_86 = arith.constant 0 : index
    %c0_87 = arith.constant 0 : index
    %132 = vector.load %arg4[%c2_84, %c0_85, %c0_86, %c0_87] : memref<5x4x1x64xf32, #tpu.memory_space<vmem>>, vector<1x1x1x64xf32>
    %133 = vector.shape_cast %132 : vector<1x1x1x64xf32> to vector<1x64xf32>
    %134 = vector.broadcast %133 : vector<1x64xf32> to vector<8x64xf32>
    %135 = arith.addf %131, %134 : vector<8x64xf32>
    %cst_88 = arith.constant 0.000000e+00 : f32
    %136 = vector.broadcast %cst_88 : f32 to vector<8x64xf32>
    %137 = arith.cmpf ogt, %135, %136 : vector<8x64xf32>
    %cst_89 = arith.constant 0.000000e+00 : f32
    %138 = vector.broadcast %cst_89 : f32 to vector<8x64xf32>
    %139 = arith.minimumf %135, %138 : vector<8x64xf32>
    %140 = math.exp %139 : vector<8x64xf32>
    %cst_90 = arith.constant 1.000000e+00 : f32
    %141 = vector.broadcast %cst_90 : f32 to vector<8x64xf32>
    %142 = arith.subf %140, %141 : vector<8x64xf32>
    %143 = arith.select %137, %135, %142 : vector<8x64xi1>, vector<8x64xf32>
    %c2_91 = arith.constant 2 : index
    %c1_92 = arith.constant 1 : index
    %c0_93 = arith.constant 0 : index
    %c0_94 = arith.constant 0 : index
    %144 = vector.load %arg3[%c2_91, %c1_92, %c0_93, %c0_94] : memref<5x2x64x64xf32, #tpu.memory_space<vmem>>, vector<1x1x64x64xf32>
    %145 = vector.shape_cast %144 : vector<1x1x64x64xf32> to vector<64x64xf32>
    %cst_95 = arith.constant dense<0.000000e+00> : vector<8x64xf32>
    %146 = tpu.matmul %143, %145, %cst_95 {dimension_numbers = #tpu.dot_dimension_numbers<[1], [0], [0], [1], [0, 0, 1, 1], [], []>} : vector<8x64xf32>, vector<64x64xf32>, vector<8x64xf32> -> vector<8x64xf32>
    %c2_96 = arith.constant 2 : index
    %c1_97 = arith.constant 1 : index
    %c0_98 = arith.constant 0 : index
    %c0_99 = arith.constant 0 : index
    %147 = vector.load %arg4[%c2_96, %c1_97, %c0_98, %c0_99] : memref<5x4x1x64xf32, #tpu.memory_space<vmem>>, vector<1x1x1x64xf32>
    %148 = vector.shape_cast %147 : vector<1x1x1x64xf32> to vector<1x64xf32>
    %149 = vector.broadcast %148 : vector<1x64xf32> to vector<8x64xf32>
    %150 = arith.addf %146, %149 : vector<8x64xf32>
    %cst_100 = arith.constant dense<0.000000e+00> : vector<64xf32>
    %151 = vector.multi_reduction <add>, %150, %cst_100 [0] : vector<8x64xf32> to vector<64xf32>
    %152 = vector.shape_cast %151 : vector<64xf32> to vector<1x64xf32>
    %cst_101 = arith.constant 8.000000e+00 : f32
    %153 = vector.broadcast %cst_101 : f32 to vector<1x64xf32>
    %154 = arith.divf %152, %153 : vector<1x64xf32>
    %155 = vector.broadcast %154 : vector<1x64xf32> to vector<8x64xf32>
    %156 = arith.subf %150, %155 : vector<8x64xf32>
    %157 = arith.mulf %156, %156 : vector<8x64xf32>
    %cst_102 = arith.constant dense<0.000000e+00> : vector<64xf32>
    %158 = vector.multi_reduction <add>, %157, %cst_102 [0] : vector<8x64xf32> to vector<64xf32>
    %159 = vector.shape_cast %158 : vector<64xf32> to vector<1x64xf32>
    %cst_103 = arith.constant 8.000000e+00 : f32
    %160 = vector.broadcast %cst_103 : f32 to vector<1x64xf32>
    %161 = arith.divf %159, %160 : vector<1x64xf32>
    %162 = vector.broadcast %154 : vector<1x64xf32> to vector<8x64xf32>
    %163 = arith.subf %150, %162 : vector<8x64xf32>
    %cst_104 = arith.constant 9.99999974E-6 : f32
    %164 = vector.broadcast %cst_104 : f32 to vector<1x64xf32>
    %165 = arith.addf %161, %164 : vector<1x64xf32>
    %166 = math.rsqrt %165 : vector<1x64xf32>
    %167 = vector.broadcast %166 : vector<1x64xf32> to vector<8x64xf32>
    %168 = arith.mulf %163, %167 : vector<8x64xf32>
    %c2_105 = arith.constant 2 : index
    %c2_106 = arith.constant 2 : index
    %c0_107 = arith.constant 0 : index
    %c0_108 = arith.constant 0 : index
    %169 = vector.load %arg4[%c2_105, %c2_106, %c0_107, %c0_108] : memref<5x4x1x64xf32, #tpu.memory_space<vmem>>, vector<1x1x1x64xf32>
    %170 = vector.shape_cast %169 : vector<1x1x1x64xf32> to vector<1x64xf32>
    %171 = vector.broadcast %170 : vector<1x64xf32> to vector<8x64xf32>
    %172 = arith.mulf %168, %171 : vector<8x64xf32>
    %c2_109 = arith.constant 2 : index
    %c3_110 = arith.constant 3 : index
    %c0_111 = arith.constant 0 : index
    %c0_112 = arith.constant 0 : index
    %173 = vector.load %arg4[%c2_109, %c3_110, %c0_111, %c0_112] : memref<5x4x1x64xf32, #tpu.memory_space<vmem>>, vector<1x1x1x64xf32>
    %174 = vector.shape_cast %173 : vector<1x1x1x64xf32> to vector<1x64xf32>
    %175 = vector.broadcast %174 : vector<1x64xf32> to vector<8x64xf32>
    %176 = arith.addf %172, %175 : vector<8x64xf32>
    %cst_113 = arith.constant 0.000000e+00 : f32
    %177 = vector.broadcast %cst_113 : f32 to vector<8x64xf32>
    %178 = arith.cmpf ogt, %176, %177 : vector<8x64xf32>
    %cst_114 = arith.constant 0.000000e+00 : f32
    %179 = vector.broadcast %cst_114 : f32 to vector<8x64xf32>
    %180 = arith.minimumf %176, %179 : vector<8x64xf32>
    %181 = math.exp %180 : vector<8x64xf32>
    %cst_115 = arith.constant 1.000000e+00 : f32
    %182 = vector.broadcast %cst_115 : f32 to vector<8x64xf32>
    %183 = arith.subf %181, %182 : vector<8x64xf32>
    %184 = arith.select %178, %176, %183 : vector<8x64xi1>, vector<8x64xf32>
    %185 = arith.addf %128, %184 : vector<8x64xf32>
    %c3_116 = arith.constant 3 : index
    %c0_117 = arith.constant 0 : index
    %c0_118 = arith.constant 0 : index
    %c0_119 = arith.constant 0 : index
    %186 = vector.load %arg3[%c3_116, %c0_117, %c0_118, %c0_119] : memref<5x2x64x64xf32, #tpu.memory_space<vmem>>, vector<1x1x64x64xf32>
    %187 = vector.shape_cast %186 : vector<1x1x64x64xf32> to vector<64x64xf32>
    %cst_120 = arith.constant dense<0.000000e+00> : vector<8x64xf32>
    %188 = tpu.matmul %185, %187, %cst_120 {dimension_numbers = #tpu.dot_dimension_numbers<[1], [0], [0], [1], [0, 0, 1, 1], [], []>} : vector<8x64xf32>, vector<64x64xf32>, vector<8x64xf32> -> vector<8x64xf32>
    %c3_121 = arith.constant 3 : index
    %c0_122 = arith.constant 0 : index
    %c0_123 = arith.constant 0 : index
    %c0_124 = arith.constant 0 : index
    %189 = vector.load %arg4[%c3_121, %c0_122, %c0_123, %c0_124] : memref<5x4x1x64xf32, #tpu.memory_space<vmem>>, vector<1x1x1x64xf32>
    %190 = vector.shape_cast %189 : vector<1x1x1x64xf32> to vector<1x64xf32>
    %191 = vector.broadcast %190 : vector<1x64xf32> to vector<8x64xf32>
    %192 = arith.addf %188, %191 : vector<8x64xf32>
    %cst_125 = arith.constant 0.000000e+00 : f32
    %193 = vector.broadcast %cst_125 : f32 to vector<8x64xf32>
    %194 = arith.cmpf ogt, %192, %193 : vector<8x64xf32>
    %cst_126 = arith.constant 0.000000e+00 : f32
    %195 = vector.broadcast %cst_126 : f32 to vector<8x64xf32>
    %196 = arith.minimumf %192, %195 : vector<8x64xf32>
    %197 = math.exp %196 : vector<8x64xf32>
    %cst_127 = arith.constant 1.000000e+00 : f32
    %198 = vector.broadcast %cst_127 : f32 to vector<8x64xf32>
    %199 = arith.subf %197, %198 : vector<8x64xf32>
    %200 = arith.select %194, %192, %199 : vector<8x64xi1>, vector<8x64xf32>
    %c3_128 = arith.constant 3 : index
    %c1_129 = arith.constant 1 : index
    %c0_130 = arith.constant 0 : index
    %c0_131 = arith.constant 0 : index
    %201 = vector.load %arg3[%c3_128, %c1_129, %c0_130, %c0_131] : memref<5x2x64x64xf32, #tpu.memory_space<vmem>>, vector<1x1x64x64xf32>
    %202 = vector.shape_cast %201 : vector<1x1x64x64xf32> to vector<64x64xf32>
    %cst_132 = arith.constant dense<0.000000e+00> : vector<8x64xf32>
    %203 = tpu.matmul %200, %202, %cst_132 {dimension_numbers = #tpu.dot_dimension_numbers<[1], [0], [0], [1], [0, 0, 1, 1], [], []>} : vector<8x64xf32>, vector<64x64xf32>, vector<8x64xf32> -> vector<8x64xf32>
    %c3_133 = arith.constant 3 : index
    %c1_134 = arith.constant 1 : index
    %c0_135 = arith.constant 0 : index
    %c0_136 = arith.constant 0 : index
    %204 = vector.load %arg4[%c3_133, %c1_134, %c0_135, %c0_136] : memref<5x4x1x64xf32, #tpu.memory_space<vmem>>, vector<1x1x1x64xf32>
    %205 = vector.shape_cast %204 : vector<1x1x1x64xf32> to vector<1x64xf32>
    %206 = vector.broadcast %205 : vector<1x64xf32> to vector<8x64xf32>
    %207 = arith.addf %203, %206 : vector<8x64xf32>
    %cst_137 = arith.constant dense<0.000000e+00> : vector<64xf32>
    %208 = vector.multi_reduction <add>, %207, %cst_137 [0] : vector<8x64xf32> to vector<64xf32>
    %209 = vector.shape_cast %208 : vector<64xf32> to vector<1x64xf32>
    %cst_138 = arith.constant 8.000000e+00 : f32
    %210 = vector.broadcast %cst_138 : f32 to vector<1x64xf32>
    %211 = arith.divf %209, %210 : vector<1x64xf32>
    %212 = vector.broadcast %211 : vector<1x64xf32> to vector<8x64xf32>
    %213 = arith.subf %207, %212 : vector<8x64xf32>
    %214 = arith.mulf %213, %213 : vector<8x64xf32>
    %cst_139 = arith.constant dense<0.000000e+00> : vector<64xf32>
    %215 = vector.multi_reduction <add>, %214, %cst_139 [0] : vector<8x64xf32> to vector<64xf32>
    %216 = vector.shape_cast %215 : vector<64xf32> to vector<1x64xf32>
    %cst_140 = arith.constant 8.000000e+00 : f32
    %217 = vector.broadcast %cst_140 : f32 to vector<1x64xf32>
    %218 = arith.divf %216, %217 : vector<1x64xf32>
    %219 = vector.broadcast %211 : vector<1x64xf32> to vector<8x64xf32>
    %220 = arith.subf %207, %219 : vector<8x64xf32>
    %cst_141 = arith.constant 9.99999974E-6 : f32
    %221 = vector.broadcast %cst_141 : f32 to vector<1x64xf32>
    %222 = arith.addf %218, %221 : vector<1x64xf32>
    %223 = math.rsqrt %222 : vector<1x64xf32>
    %224 = vector.broadcast %223 : vector<1x64xf32> to vector<8x64xf32>
    %225 = arith.mulf %220, %224 : vector<8x64xf32>
    %c3_142 = arith.constant 3 : index
    %c2_143 = arith.constant 2 : index
    %c0_144 = arith.constant 0 : index
    %c0_145 = arith.constant 0 : index
    %226 = vector.load %arg4[%c3_142, %c2_143, %c0_144, %c0_145] : memref<5x4x1x64xf32, #tpu.memory_space<vmem>>, vector<1x1x1x64xf32>
    %227 = vector.shape_cast %226 : vector<1x1x1x64xf32> to vector<1x64xf32>
    %228 = vector.broadcast %227 : vector<1x64xf32> to vector<8x64xf32>
    %229 = arith.mulf %225, %228 : vector<8x64xf32>
    %c3_146 = arith.constant 3 : index
    %c3_147 = arith.constant 3 : index
    %c0_148 = arith.constant 0 : index
    %c0_149 = arith.constant 0 : index
    %230 = vector.load %arg4[%c3_146, %c3_147, %c0_148, %c0_149] : memref<5x4x1x64xf32, #tpu.memory_space<vmem>>, vector<1x1x1x64xf32>
    %231 = vector.shape_cast %230 : vector<1x1x1x64xf32> to vector<1x64xf32>
    %232 = vector.broadcast %231 : vector<1x64xf32> to vector<8x64xf32>
    %233 = arith.addf %229, %232 : vector<8x64xf32>
    %cst_150 = arith.constant 0.000000e+00 : f32
    %234 = vector.broadcast %cst_150 : f32 to vector<8x64xf32>
    %235 = arith.cmpf ogt, %233, %234 : vector<8x64xf32>
    %cst_151 = arith.constant 0.000000e+00 : f32
    %236 = vector.broadcast %cst_151 : f32 to vector<8x64xf32>
    %237 = arith.minimumf %233, %236 : vector<8x64xf32>
    %238 = math.exp %237 : vector<8x64xf32>
    %cst_152 = arith.constant 1.000000e+00 : f32
    %239 = vector.broadcast %cst_152 : f32 to vector<8x64xf32>
    %240 = arith.subf %238, %239 : vector<8x64xf32>
    %241 = arith.select %235, %233, %240 : vector<8x64xi1>, vector<8x64xf32>
    %242 = arith.addf %185, %241 : vector<8x64xf32>
    %c4 = arith.constant 4 : index
    %c0_153 = arith.constant 0 : index
    %c0_154 = arith.constant 0 : index
    %c0_155 = arith.constant 0 : index
    %243 = vector.load %arg3[%c4, %c0_153, %c0_154, %c0_155] : memref<5x2x64x64xf32, #tpu.memory_space<vmem>>, vector<1x1x64x64xf32>
    %244 = vector.shape_cast %243 : vector<1x1x64x64xf32> to vector<64x64xf32>
    %cst_156 = arith.constant dense<0.000000e+00> : vector<8x64xf32>
    %245 = tpu.matmul %242, %244, %cst_156 {dimension_numbers = #tpu.dot_dimension_numbers<[1], [0], [0], [1], [0, 0, 1, 1], [], []>} : vector<8x64xf32>, vector<64x64xf32>, vector<8x64xf32> -> vector<8x64xf32>
    %c4_157 = arith.constant 4 : index
    %c0_158 = arith.constant 0 : index
    %c0_159 = arith.constant 0 : index
    %c0_160 = arith.constant 0 : index
    %246 = vector.load %arg4[%c4_157, %c0_158, %c0_159, %c0_160] : memref<5x4x1x64xf32, #tpu.memory_space<vmem>>, vector<1x1x1x64xf32>
    %247 = vector.shape_cast %246 : vector<1x1x1x64xf32> to vector<1x64xf32>
    %248 = vector.broadcast %247 : vector<1x64xf32> to vector<8x64xf32>
    %249 = arith.addf %245, %248 : vector<8x64xf32>
    %cst_161 = arith.constant 0.000000e+00 : f32
    %250 = vector.broadcast %cst_161 : f32 to vector<8x64xf32>
    %251 = arith.cmpf ogt, %249, %250 : vector<8x64xf32>
    %cst_162 = arith.constant 0.000000e+00 : f32
    %252 = vector.broadcast %cst_162 : f32 to vector<8x64xf32>
    %253 = arith.minimumf %249, %252 : vector<8x64xf32>
    %254 = math.exp %253 : vector<8x64xf32>
    %cst_163 = arith.constant 1.000000e+00 : f32
    %255 = vector.broadcast %cst_163 : f32 to vector<8x64xf32>
    %256 = arith.subf %254, %255 : vector<8x64xf32>
    %257 = arith.select %251, %249, %256 : vector<8x64xi1>, vector<8x64xf32>
    %c4_164 = arith.constant 4 : index
    %c1_165 = arith.constant 1 : index
    %c0_166 = arith.constant 0 : index
    %c0_167 = arith.constant 0 : index
    %258 = vector.load %arg3[%c4_164, %c1_165, %c0_166, %c0_167] : memref<5x2x64x64xf32, #tpu.memory_space<vmem>>, vector<1x1x64x64xf32>
    %259 = vector.shape_cast %258 : vector<1x1x64x64xf32> to vector<64x64xf32>
    %cst_168 = arith.constant dense<0.000000e+00> : vector<8x64xf32>
    %260 = tpu.matmul %257, %259, %cst_168 {dimension_numbers = #tpu.dot_dimension_numbers<[1], [0], [0], [1], [0, 0, 1, 1], [], []>} : vector<8x64xf32>, vector<64x64xf32>, vector<8x64xf32> -> vector<8x64xf32>
    %c4_169 = arith.constant 4 : index
    %c1_170 = arith.constant 1 : index
    %c0_171 = arith.constant 0 : index
    %c0_172 = arith.constant 0 : index
    %261 = vector.load %arg4[%c4_169, %c1_170, %c0_171, %c0_172] : memref<5x4x1x64xf32, #tpu.memory_space<vmem>>, vector<1x1x1x64xf32>
    %262 = vector.shape_cast %261 : vector<1x1x1x64xf32> to vector<1x64xf32>
    %263 = vector.broadcast %262 : vector<1x64xf32> to vector<8x64xf32>
    %264 = arith.addf %260, %263 : vector<8x64xf32>
    %cst_173 = arith.constant dense<0.000000e+00> : vector<64xf32>
    %265 = vector.multi_reduction <add>, %264, %cst_173 [0] : vector<8x64xf32> to vector<64xf32>
    %266 = vector.shape_cast %265 : vector<64xf32> to vector<1x64xf32>
    %cst_174 = arith.constant 8.000000e+00 : f32
    %267 = vector.broadcast %cst_174 : f32 to vector<1x64xf32>
    %268 = arith.divf %266, %267 : vector<1x64xf32>
    %269 = vector.broadcast %268 : vector<1x64xf32> to vector<8x64xf32>
    %270 = arith.subf %264, %269 : vector<8x64xf32>
    %271 = arith.mulf %270, %270 : vector<8x64xf32>
    %cst_175 = arith.constant dense<0.000000e+00> : vector<64xf32>
    %272 = vector.multi_reduction <add>, %271, %cst_175 [0] : vector<8x64xf32> to vector<64xf32>
    %273 = vector.shape_cast %272 : vector<64xf32> to vector<1x64xf32>
    %cst_176 = arith.constant 8.000000e+00 : f32
    %274 = vector.broadcast %cst_176 : f32 to vector<1x64xf32>
    %275 = arith.divf %273, %274 : vector<1x64xf32>
    %276 = vector.broadcast %268 : vector<1x64xf32> to vector<8x64xf32>
    %277 = arith.subf %264, %276 : vector<8x64xf32>
    %cst_177 = arith.constant 9.99999974E-6 : f32
    %278 = vector.broadcast %cst_177 : f32 to vector<1x64xf32>
    %279 = arith.addf %275, %278 : vector<1x64xf32>
    %280 = math.rsqrt %279 : vector<1x64xf32>
    %281 = vector.broadcast %280 : vector<1x64xf32> to vector<8x64xf32>
    %282 = arith.mulf %277, %281 : vector<8x64xf32>
    %c4_178 = arith.constant 4 : index
    %c2_179 = arith.constant 2 : index
    %c0_180 = arith.constant 0 : index
    %c0_181 = arith.constant 0 : index
    %283 = vector.load %arg4[%c4_178, %c2_179, %c0_180, %c0_181] : memref<5x4x1x64xf32, #tpu.memory_space<vmem>>, vector<1x1x1x64xf32>
    %284 = vector.shape_cast %283 : vector<1x1x1x64xf32> to vector<1x64xf32>
    %285 = vector.broadcast %284 : vector<1x64xf32> to vector<8x64xf32>
    %286 = arith.mulf %282, %285 : vector<8x64xf32>
    %c4_182 = arith.constant 4 : index
    %c3_183 = arith.constant 3 : index
    %c0_184 = arith.constant 0 : index
    %c0_185 = arith.constant 0 : index
    %287 = vector.load %arg4[%c4_182, %c3_183, %c0_184, %c0_185] : memref<5x4x1x64xf32, #tpu.memory_space<vmem>>, vector<1x1x1x64xf32>
    %288 = vector.shape_cast %287 : vector<1x1x1x64xf32> to vector<1x64xf32>
    %289 = vector.broadcast %288 : vector<1x64xf32> to vector<8x64xf32>
    %290 = arith.addf %286, %289 : vector<8x64xf32>
    %cst_186 = arith.constant 0.000000e+00 : f32
    %291 = vector.broadcast %cst_186 : f32 to vector<8x64xf32>
    %292 = arith.cmpf ogt, %290, %291 : vector<8x64xf32>
    %cst_187 = arith.constant 0.000000e+00 : f32
    %293 = vector.broadcast %cst_187 : f32 to vector<8x64xf32>
    %294 = arith.minimumf %290, %293 : vector<8x64xf32>
    %295 = math.exp %294 : vector<8x64xf32>
    %cst_188 = arith.constant 1.000000e+00 : f32
    %296 = vector.broadcast %cst_188 : f32 to vector<8x64xf32>
    %297 = arith.subf %295, %296 : vector<8x64xf32>
    %298 = arith.select %292, %290, %297 : vector<8x64xi1>, vector<8x64xf32>
    %299 = arith.addf %242, %298 : vector<8x64xf32>
    %c0_189 = arith.constant 0 : index
    %c0_190 = arith.constant 0 : index
    %300 = vector.load %arg5[%c0_189, %c0_190] : memref<64x128xf32, #tpu.memory_space<vmem>>, vector<64x128xf32>
    %cst_191 = arith.constant dense<0.000000e+00> : vector<8x128xf32>
    %301 = tpu.matmul %299, %300, %cst_191 {dimension_numbers = #tpu.dot_dimension_numbers<[1], [0], [0], [1], [0, 0, 1, 1], [], []>} : vector<8x64xf32>, vector<64x128xf32>, vector<8x128xf32> -> vector<8x128xf32>
    %c0_192 = arith.constant 0 : index
    %c0_193 = arith.constant 0 : index
    %302 = vector.load %arg6[%c0_192, %c0_193] : memref<1x128xf32, #tpu.memory_space<vmem>>, vector<1x128xf32>
    %303 = vector.broadcast %302 : vector<1x128xf32> to vector<8x128xf32>
    %304 = arith.addf %301, %303 : vector<8x128xf32>
    %c0_194 = arith.constant 0 : index
    %c0_195 = arith.constant 0 : index
    %305 = vector.load %arg7[%c0_194, %c0_195] : memref<8x128xf32, #tpu.memory_space<vmem>>, vector<8x128xf32>
    tpu.vector_store %arg7[%c0_194, %c0_195], %304 {strides = array<i32>} : memref<8x128xf32, #tpu.memory_space<vmem>>, vector<8x128xf32>,
    return
  }
}

</mosaic_0001>

<llo_original>
// kernel: tpu_custom_call.1
$region0: #{tpu_custom_call.1}
  #allocation0 [shape = 'u32[]', space=smem, size = 0x4, offset = 0x4, fixed_abs, tag = 'smem constant byte address 0x4 - core index']
  #allocation1 [shape = 'u32[72,128]{1,0:T(1,128)}', space=vmem, size = 0x9000, scoped, tag = 'internal scratch']
  %s0 = inlined_call_operand.hbm [shape: f32[8,16], index: 0, kind: input, shape index: {}]
  %s1 = inlined_call_operand.hbm [shape: f32[16,64], index: 1, kind: input, shape index: {}]
  %s2 = inlined_call_operand.vmem [shape: f32[1,64], index: 2, kind: input, shape index: {}]
  %s3 = inlined_call_operand.hbm [shape: f32[5,2,64,64], index: 3, kind: input, shape index: {}]
  %s4 = inlined_call_operand.hbm [shape: f32[5,4,1,64], index: 4, kind: input, shape index: {}]
  %s5 = inlined_call_operand.hbm [shape: f32[64,128], index: 5, kind: input, shape index: {}]
  %s6 = inlined_call_operand.vmem [shape: f32[1,128], index: 6, kind: input, shape index: {}]
  %s7 = inlined_call_operand.hbm [shape: f32[8,128], index: 7, kind: output, shape index: {}]
  %s8 = sld [smem:[#allocation0]]
  $region58: #{tpu_custom_call.1} parent=0
    _
  %s10 = ssub.s32 1, %s8
  %s11 = scalar_select 0, %s10, %s8
  $region1: #{tpu_custom_call.1} parent=0
    #allocation2 [shape = 'u8[4096]{0}', space=vmem, size = 0x1000, scoped, tag = 'input window, operand 0, single buffered']
    #allocation3 [shape = 's32[1]{0}', space=sflag, size = 0x4, scoped, tag = 'scoped memory for tpu_custom_call.1']
    #allocation4 [shape = 's32[1]{0}', space=sflag, size = 0x4, scoped, tag = 'scoped memory for tpu_custom_call.1']
    #allocation5 [shape = 'u8[8192]{0}', space=vmem, size = 0x2000, scoped, tag = 'input window, operand 1, single buffered']
    #allocation6 [shape = 's32[1]{0}', space=sflag, size = 0x4, scoped, tag = 'scoped memory for tpu_custom_call.1']
    #allocation7 [shape = 'u8[327680]{0}', space=vmem, size = 0x50000, scoped, tag = 'input window, operand 3, single buffered']
    #allocation8 [shape = 'u8[10240]{0}', space=vmem, size = 0x2800, scoped, tag = 'input window, operand 4, single buffered']
    #allocation9 [shape = 's32[1]{0}', space=sflag, size = 0x4, scoped, tag = 'scoped memory for tpu_custom_call.1']
    #allocation10 [shape = 'u8[32768]{0}', space=vmem, size = 0x8000, scoped, tag = 'input window, operand 5, single buffered']
    #allocation11 [shape = 'u8[4096]{0}', space=vmem, size = 0x1000, scoped, tag = 'output window, operand 0, single buffered']
    %12 = vsyncpa [#allocation3], 0
    %13 = vsyncpa [#allocation6], 0
    %14 = vsyncpa [#allocation9], 0
    %15 = vsyncpa [#allocation4], 0
    // Predicated region
    $region2: #{tpu_custom_call.1} parent=1 // pred_check
      _
    $region3: #{tpu_custom_call.1} parent=1 // pred_check_branch
      %17 = sbr.rel (0) target = $region5
    $region4: #{tpu_custom_call.1} parent=1 // pred_region
      %19 = vsyncadd [#allocation3], 0
      %s21 = sshll.u32 %s0, 4
      %s22 = int_to_ptr.hbm [resolvable:$true] %s21
      %s23 = sshll.u32 [#allocation2], 4
      %s24 = int_to_ptr.vmem [resolvable:$true] %s23
      %26 = dma.hbm_to_vmem [thread:$0]  %s22, 128, %s24, [#allocation3]
    $region5: #{tpu_custom_call.1} parent=1 // pred_fallthru
      _
    // Predicated region
    $region6: #{tpu_custom_call.1} parent=1 // pred_check
      _
    $region7: #{tpu_custom_call.1} parent=1 // pred_check_branch
      %28 = sbr.rel (0) target = $region9
    $region8: #{tpu_custom_call.1} parent=1 // pred_region
      %30 = vsyncadd [#allocation6], 0
      %s31 = sshll.u32 %s1, 4
      %s32 = int_to_ptr.hbm [resolvable:$true] %s31
      %s33 = sshll.u32 [#allocation5], 4
      %s34 = int_to_ptr.vmem [resolvable:$true] %s33
      %39 = dma.hbm_to_vmem [thread:$0]  %s32, 256, %s34, [#allocation6], 128, 128, 8
    $region9: #{tpu_custom_call.1} parent=1 // pred_fallthru
      _
    // Predicated region
    $region10: #{tpu_custom_call.1} parent=1 // pred_check
      _
    $region11: #{tpu_custom_call.1} parent=1 // pred_check_branch
      %41 = sbr.rel (0) target = $region13
    $region12: #{tpu_custom_call.1} parent=1 // pred_region
      _
    $region13: #{tpu_custom_call.1} parent=1 // pred_fallthru
      _
    // Predicated region
    $region14: #{tpu_custom_call.1} parent=1 // pred_check
      _
    $region15: #{tpu_custom_call.1} parent=1 // pred_check_branch
      %43 = sbr.rel (0) target = $region17
    $region16: #{tpu_custom_call.1} parent=1 // pred_region
      %45 = vsyncadd [#allocation6], 0
      %s46 = sshll.u32 %s3, 4
      %s47 = int_to_ptr.hbm [resolvable:$true] %s46
      %s48 = sshll.u32 [#allocation7], 4
      %s49 = int_to_ptr.vmem [resolvable:$true] %s48
      %54 = dma.hbm_to_vmem [thread:$0]  %s47, 10240, %s49, [#allocation6], 128, 128, 8
    $region17: #{tpu_custom_call.1} parent=1 // pred_fallthru
      _
    // Predicated region
    $region18: #{tpu_custom_call.1} parent=1 // pred_check
      _
    $region19: #{tpu_custom_call.1} parent=1 // pred_check_branch
      %56 = sbr.rel (0) target = $region21
    $region20: #{tpu_custom_call.1} parent=1 // pred_region
      %58 = vsyncadd [#allocation9], 0
      %s59 = sshll.u32 %s4, 4
      %s60 = int_to_ptr.hbm [resolvable:$true] %s59
      %s61 = sshll.u32 [#allocation8], 4
      %s62 = int_to_ptr.vmem [resolvable:$true] %s61
      %67 = dma.hbm_to_vmem [thread:$0]  %s60, 320, %s62, [#allocation9], 16, 16, 1
    $region21: #{tpu_custom_call.1} parent=1 // pred_fallthru
      _
    // Predicated region
    $region22: #{tpu_custom_call.1} parent=1 // pred_check
      _
    $region23: #{tpu_custom_call.1} parent=1 // pred_check_branch
      %69 = sbr.rel (0) target = $region25
    $region24: #{tpu_custom_call.1} parent=1 // pred_region
      %71 = vsyncadd [#allocation9], 0
      %s72 = sshll.u32 %s5, 4
      %s73 = int_to_ptr.hbm [resolvable:$true] %s72
      %s74 = sshll.u32 [#allocation10], 4
      %s75 = int_to_ptr.vmem [resolvable:$true] %s74
      %80 = dma.hbm_to_vmem [thread:$0]  %s73, 1024, %s75, [#allocation9], 128, 128, 8
    $region25: #{tpu_custom_call.1} parent=1 // pred_fallthru
      _
    // Predicated region
    $region26: #{tpu_custom_call.1} parent=1 // pred_check
      _
    $region27: #{tpu_custom_call.1} parent=1 // pred_check_branch
      %82 = sbr.rel (0) target = $region29
    $region28: #{tpu_custom_call.1} parent=1 // pred_region
      _
    $region29: #{tpu_custom_call.1} parent=1 // pred_fallthru
      _
    // Predicated region
    $region30: #{tpu_custom_call.1} parent=1 // pred_check
      _
    $region31: #{tpu_custom_call.1} parent=1 // pred_check_branch
      %84 = sbr.rel (0) target = $region33
    $region32: #{tpu_custom_call.1} parent=1 // pred_region
      %86 = dma.done [#allocation3], 128
    $region33: #{tpu_custom_call.1} parent=1 // pred_fallthru
      _
    // Predicated region
    $region34: #{tpu_custom_call.1} parent=1 // pred_check
      _
    $region35: #{tpu_custom_call.1} parent=1 // pred_check_branch
      %88 = sbr.rel (0) target = $region37
    $region36: #{tpu_custom_call.1} parent=1 // pred_region
      %90 = dma.done [#allocation6], 256
    $region37: #{tpu_custom_call.1} parent=1 // pred_fallthru
      _
    // Predicated region
    $region38: #{tpu_custom_call.1} parent=1 // pred_check
      _
    $region39: #{tpu_custom_call.1} parent=1 // pred_check_branch
      %92 = sbr.rel (0) target = $region41
    $region40: #{tpu_custom_call.1} parent=1 // pred_region
      %94 = dma.done [#allocation6], 10240
    $region41: #{tpu_custom_call.1} parent=1 // pred_fallthru
      _
    // Predicated region
    $region42: #{tpu_custom_call.1} parent=1 // pred_check
      _
    $region43: #{tpu_custom_call.1} parent=1 // pred_check_branch
      %96 = sbr.rel (0) target = $region45
    $region44: #{tpu_custom_call.1} parent=1 // pred_region
      %98 = dma.done [#allocation9], 320
    $region45: #{tpu_custom_call.1} parent=1 // pred_fallthru
      _
    // Predicated region
    $region46: #{tpu_custom_call.1} parent=1 // pred_check
      _
    $region47: #{tpu_custom_call.1} parent=1 // pred_check_branch
      %100 = sbr.rel (0) target = $region49
    $region48: #{tpu_custom_call.1} parent=1 // pred_region
      %102 = dma.done [#allocation9], 1024
    $region49: #{tpu_custom_call.1} parent=1 // pred_fallthru
      _
    %v103 = vld [vmem:[#allocation2] sm:$0xff]
    %v104 = vld [vmem:[#allocation5] sm:$0xff]
    %v105 = vld [vmem:[#allocation5 + $0x8] sm:$0xff]
    %v106 = vld [vmem:[%s2] sm:$0x1]
    %v108 = vperm.slane %v106, 0
    %vm110 = vcmask 130048
    %v112 = vsel %vm110, %v103, 0
    %114 = vmatpush.msra.mxu0 0.0
    %115 = vmatpush.msra.mxu0 0.0
    %116 = vmatpush.msra.mxu0 0.0
    %117 = vmatpush.msra.mxu0 0.0
    %118 = vmatpush.msra.mxu0 0.0
    %119 = vmatpush.msra.mxu0 0.0
    %120 = vmatpush.msra.mxu0 0.0
    %121 = vmatpush.msra.mxu0 0.0
    %122 = vmatpush.msra.mxu0 0.0
    %123 = vmatpush.msra.mxu0 0.0
    %124 = vmatpush.msra.mxu0 0.0
    %125 = vmatpush.msra.mxu0 0.0
    %126 = vmatpush.msra.mxu0 0.0
    %127 = vmatpush.msra.mxu0 0.0
    %128 = vmatpush.msra.mxu0 %v105
    %129 = vmatpush.msra.mxu0 %v104
    %130 = vmatmul.f32.gmra.mxu0 %v112
    %v131 = vpop.f32.mrf.mxu0
    %v132 = vadd.f32 %v108, %v131
    %133 = vdwg.mxu0
    %vm134 = vcmp.gt.f32.partialorder %v132, 0.0
    %v135 = vmin.f32 %v132, 0.0
    %v136 = vmul.f32 %v135, 1.442695
    %v137 = vpow.pop %v136
    %v138 = vsub.f32 %v137, 1.0
    %v139 = vsel %vm134, %v132, %v138
    %v140 = vadd.f32 %v132, %v139
    %v141 = vld [vmem:[#allocation7] sm:$0xff]
    %v142 = vld [vmem:[#allocation7 + $0x8] sm:$0xff]
    %v143 = vld [vmem:[#allocation7 + $0x10] sm:$0xff]
    %v144 = vld [vmem:[#allocation7 + $0x18] sm:$0xff]
    %v145 = vld [vmem:[#allocation7 + $0x20] sm:$0xff]
    %v146 = vld [vmem:[#allocation7 + $0x28] sm:$0xff]
    %v147 = vld [vmem:[#allocation7 + $0x30] sm:$0xff]
    %v148 = vld [vmem:[#allocation7 + $0x38] sm:$0xff]
    %v149 = vld [vmem:[#allocation8] sm:$0x1]
    %v151 = vperm.slane %v149, 0
    %vm153 = vcmask 523264
    %v155 = vsel %vm153, %v140, 0
    %157 = vmatpush.msra.mxu0 0.0
    %158 = vmatpush.msra.mxu0 0.0
    %159 = vmatpush.msra.mxu0 0.0
    %160 = vmatpush.msra.mxu0 0.0
    %161 = vmatpush.msra.mxu0 0.0
    %162 = vmatpush.msra.mxu0 0.0
    %163 = vmatpush.msra.mxu0 0.0
    %164 = vmatpush.msra.mxu0 0.0
    %165 = vmatpush.msra.mxu0 %v148
    %166 = vmatpush.msra.mxu0 %v147
    %167 = vmatpush.msra.mxu0 %v146
    %168 = vmatpush.msra.mxu0 %v145
    %169 = vmatpush.msra.mxu0 %v144
    %170 = vmatpush.msra.mxu0 %v143
    %171 = vmatpush.msra.mxu0 %v142
    %172 = vmatpush.msra.mxu0 %v141
    %173 = vmatmul.f32.gmra.mxu0 %v155
    %v174 = vpop.f32.mrf.mxu0
    %v175 = vadd.f32 %v151, %v174
    %176 = vdwg.mxu0
    %vm177 = vcmp.gt.f32.partialorder %v175, 0.0
    %v178 = vmin.f32 %v175, 0.0
    %v179 = vmul.f32 %v178, 1.442695
    %v180 = vpow.pop %v179
    %v181 = vsub.f32 %v180, 1.0
    %v182 = vsel %vm177, %v175, %v181
    %s183 = scalar_lea.vmem [#allocation7], 64
    %v184 = vld [vmem:[%s183] sm:$0xff]
    %v185 = vld [vmem:[%s183 + $0x8] sm:$0xff]
    %v186 = vld [vmem:[%s183 + $0x10] sm:$0xff]
    %v187 = vld [vmem:[%s183 + $0x18] sm:$0xff]
    %v188 = vld [vmem:[%s183 + $0x20] sm:$0xff]
    %v189 = vld [vmem:[%s183 + $0x28] sm:$0xff]
    %v190 = vld [vmem:[%s183 + $0x30] sm:$0xff]
    %v191 = vld [vmem:[%s183 + $0x38] sm:$0xff]
    %s192 = scalar_lea.vmem [#allocation8], 1
    %v193 = vld [vmem:[%s192] sm:$0x1]
    %v195 = vperm.slane %v193, 0
    %v198 = vsel %vm153, %v182, 0
    %200 = vmatpush.msra.mxu0 0.0
    %201 = vmatpush.msra.mxu0 0.0
    %202 = vmatpush.msra.mxu0 0.0
    %203 = vmatpush.msra.mxu0 0.0
    %204 = vmatpush.msra.mxu0 0.0
    %205 = vmatpush.msra.mxu0 0.0
    %206 = vmatpush.msra.mxu0 0.0
    %207 = vmatpush.msra.mxu0 0.0
    %208 = vmatpush.msra.mxu0 %v191
    %209 = vmatpush.msra.mxu0 %v190
    %210 = vmatpush.msra.mxu0 %v189
    %211 = vmatpush.msra.mxu0 %v188
    %212 = vmatpush.msra.mxu0 %v187
    %213 = vmatpush.msra.mxu0 %v186
    %214 = vmatpush.msra.mxu0 %v185
    %215 = vmatpush.msra.mxu0 %v184
    %216 = vmatmul.f32.gmra.mxu0 %v198
    %v217 = vpop.f32.mrf.mxu0
    %v218 = vadd.f32 %v195, %v217
    %219 = vdwg.mxu0
    %v220 = vsel %vm153, %v218, 0.0
    %v221 = vrot.slane %v220, 4
    %v222 = vadd.f32 %v220, %v221
    %v223 = vrot.slane %v222, 2
    %v224 = vadd.f32 %v222, %v223
    %v225 = vrot.slane %v224, 1
    %v226 = vadd.f32 %v224, %v225
    %v227 = vrcp.pop 8.0
    %v228 = vmul.f32 8.0, %v227
    %v229 = vsub.f32 1.0, %v228
    %v230 = vmul.f32 %v227, %v229
    %v231 = vadd.f32 %v227, %v230
    %vm232 = vweird.f32 %v227
    %v233 = vsel %vm232, %v227, %v231
    %v234 = vmul.f32 %v226, %v233
    %v235 = vsub.f32 %v218, %v234
    %v236 = vmul.f32 %v235, %v235
    %v237 = vsel %vm153, %v236, 0.0
    %v238 = vrot.slane %v237, 4
    %v239 = vadd.f32 %v237, %v238
    %v240 = vrot.slane %v239, 2
    %v241 = vadd.f32 %v239, %v240
    %v242 = vrot.slane %v241, 1
    %v243 = vadd.f32 %v241, %v242
    %v244 = vmul.f32 %v243, %v233
    %v245 = vadd.f32 %v244, 1e-05
    %v246 = vrsqrt.pop %v245
    %v247 = vmul.f32 %v246, %v245
    %v248 = vmul.f32 %v247, %v246
    %v249 = vmul.f32 0.5, %v248
    %v250 = vsub.f32 1.5, %v249
    %v251 = vmul.f32 %v246, %v250
    %vm252 = vweird.f32 %v245
    %vm253 = vweird.f32 %v246
    %vm254 = vmor %vm252, %vm253
    %v255 = vsel %vm254, %v246, %v251
    %v256 = vmul.f32 %v235, %v255
    %s257 = scalar_lea.vmem [#allocation8], 2
    %v258 = vld [vmem:[%s257] sm:$0x1]
    %v260 = vperm.slane %v258, 0
    %v262 = vmul.f32 %v256, %v260
    %s263 = scalar_lea.vmem [#allocation8], 3
    %v264 = vld [vmem:[%s263] sm:$0x1]
    %v266 = vperm.slane %v264, 0
    %v268 = vadd.f32 %v262, %v266
    %vm269 = vcmp.gt.f32.partialorder %v268, 0.0
    %v270 = vmin.f32 %v268, 0.0
    %v271 = vmul.f32 %v270, 1.442695
    %v272 = vpow.pop %v271
    %v273 = vsub.f32 %v272, 1.0
    %v274 = vsel %vm269, %v268, %v273
    %v275 = vadd.f32 %v140, %v274
    %s276 = scalar_lea.vmem [#allocation7], 128
    %v277 = vld [vmem:[%s276] sm:$0xff]
    %v278 = vld [vmem:[%s276 + $0x8] sm:$0xff]
    %v279 = vld [vmem:[%s276 + $0x10] sm:$0xff]
    %v280 = vld [vmem:[%s276 + $0x18] sm:$0xff]
    %v281 = vld [vmem:[%s276 + $0x20] sm:$0xff]
    %v282 = vld [vmem:[%s276 + $0x28] sm:$0xff]
    %v283 = vld [vmem:[%s276 + $0x30] sm:$0xff]
    %v284 = vld [vmem:[%s276 + $0x38] sm:$0xff]
    %s285 = scalar_lea.vmem [#allocation8], 4
    %v286 = vld [vmem:[%s285] sm:$0x1]
    %v288 = vperm.slane %v286, 0
    %v291 = vsel %vm153, %v275, 0
    %293 = vmatpush.msra.mxu0 0.0
    %294 = vmatpush.msra.mxu0 0.0
    %295 = vmatpush.msra.mxu0 0.0
    %296 = vmatpush.msra.mxu0 0.0
    %297 = vmatpush.msra.mxu0 0.0
    %298 = vmatpush.msra.mxu0 0.0
    %299 = vmatpush.msra.mxu0 0.0
    %300 = vmatpush.msra.mxu0 0.0
    %301 = vmatpush.msra.mxu0 %v284
    %302 = vmatpush.msra.mxu0 %v283
    %303 = vmatpush.msra.mxu0 %v282
    %304 = vmatpush.msra.mxu0 %v281
    %305 = vmatpush.msra.mxu0 %v280
    %306 = vmatpush.msra.mxu0 %v279
    %307 = vmatpush.msra.mxu0 %v278
    %308 = vmatpush.msra.mxu0 %v277
    %309 = vmatmul.f32.gmra.mxu0 %v291
    %v310 = vpop.f32.mrf.mxu0
    %v311 = vadd.f32 %v288, %v310
    %312 = vdwg.mxu0
    %vm313 = vcmp.gt.f32.partialorder %v311, 0.0
    %v314 = vmin.f32 %v311, 0.0
    %v315 = vmul.f32 %v314, 1.442695
    %v316 = vpow.pop %v315
    %v317 = vsub.f32 %v316, 1.0
    %v318 = vsel %vm313, %v311, %v317
    %s319 = scalar_lea.vmem [#allocation7], 192
    %v320 = vld [vmem:[%s319] sm:$0xff]
    %v321 = vld [vmem:[%s319 + $0x8] sm:$0xff]
    %v322 = vld [vmem:[%s319 + $0x10] sm:$0xff]
    %v323 = vld [vmem:[%s319 + $0x18] sm:$0xff]
    %v324 = vld [vmem:[%s319 + $0x20] sm:$0xff]
    %v325 = vld [vmem:[%s319 + $0x28] sm:$0xff]
    %v326 = vld [vmem:[%s319 + $0x30] sm:$0xff]
    %v327 = vld [vmem:[%s319 + $0x38] sm:$0xff]
    %s328 = scalar_lea.vmem [#allocation8], 5
    %v329 = vld [vmem:[%s328] sm:$0x1]
    %v331 = vperm.slane %v329, 0
    %v334 = vsel %vm153, %v318, 0
    %336 = vmatpush.msra.mxu0 0.0
    %337 = vmatpush.msra.mxu0 0.0
    %338 = vmatpush.msra.mxu0 0.0
    %339 = vmatpush.msra.mxu0 0.0
    %340 = vmatpush.msra.mxu0 0.0
    %341 = vmatpush.msra.mxu0 0.0
    %342 = vmatpush.msra.mxu0 0.0
    %343 = vmatpush.msra.mxu0 0.0
    %344 = vmatpush.msra.mxu0 %v327
    %345 = vmatpush.msra.mxu0 %v326
    %346 = vmatpush.msra.mxu0 %v325
    %347 = vmatpush.msra.mxu0 %v324
    %348 = vmatpush.msra.mxu0 %v323
    %349 = vmatpush.msra.mxu0 %v322
    %350 = vmatpush.msra.mxu0 %v321
    %351 = vmatpush.msra.mxu0 %v320
    %352 = vmatmul.f32.gmra.mxu0 %v334
    %v353 = vpop.f32.mrf.mxu0
    %v354 = vadd.f32 %v331, %v353
    %355 = vdwg.mxu0
    %v356 = vsel %vm153, %v354, 0.0
    %v357 = vrot.slane %v356, 4
    %v358 = vadd.f32 %v356, %v357
    %v359 = vrot.slane %v358, 2
    %v360 = vadd.f32 %v358, %v359
    %v361 = vrot.slane %v360, 1
    %v362 = vadd.f32 %v360, %v361
    %v363 = vmul.f32 %v362, %v233
    %v364 = vsub.f32 %v354, %v363
    %v365 = vmul.f32 %v364, %v364
    %v366 = vsel %vm153, %v365, 0.0
    %v367 = vrot.slane %v366, 4
    %v368 = vadd.f32 %v366, %v367
    %v369 = vrot.slane %v368, 2
    %v370 = vadd.f32 %v368, %v369
    %v371 = vrot.slane %v370, 1
    %v372 = vadd.f32 %v370, %v371
    %v373 = vmul.f32 %v372, %v233
    %v374 = vadd.f32 %v373, 1e-05
    %v375 = vrsqrt.pop %v374
    %v376 = vmul.f32 %v375, %v374
    %v377 = vmul.f32 %v376, %v375
    %v378 = vmul.f32 0.5, %v377
    %v379 = vsub.f32 1.5, %v378
    %v380 = vmul.f32 %v375, %v379
    %vm381 = vweird.f32 %v374
    %vm382 = vweird.f32 %v375
    %vm383 = vmor %vm381, %vm382
    %v384 = vsel %vm383, %v375, %v380
    %v385 = vmul.f32 %v364, %v384
    %s386 = scalar_lea.vmem [#allocation8], 6
    %v387 = vld [vmem:[%s386] sm:$0x1]
    %v389 = vperm.slane %v387, 0
    %v391 = vmul.f32 %v385, %v389
    %s392 = scalar_lea.vmem [#allocation8], 7
    %v393 = vld [vmem:[%s392] sm:$0x1]
    %v395 = vperm.slane %v393, 0
    %v397 = vadd.f32 %v391, %v395
    %vm398 = vcmp.gt.f32.partialorder %v397, 0.0
    %v399 = vmin.f32 %v397, 0.0
    %v400 = vmul.f32 %v399, 1.442695
    %v401 = vpow.pop %v400
    %v402 = vsub.f32 %v401, 1.0
    %v403 = vsel %vm398, %v397, %v402
    %v404 = vadd.f32 %v275, %v403
    %s405 = scalar_lea.vmem [#allocation7], 256
    %v406 = vld [vmem:[%s405] sm:$0xff]
    %v407 = vld [vmem:[%s405 + $0x8] sm:$0xff]
    %v408 = vld [vmem:[%s405 + $0x10] sm:$0xff]
    %v409 = vld [vmem:[%s405 + $0x18] sm:$0xff]
    %v410 = vld [vmem:[%s405 + $0x20] sm:$0xff]
    %v411 = vld [vmem:[%s405 + $0x28] sm:$0xff]
    %v412 = vld [vmem:[%s405 + $0x30] sm:$0xff]
    %v413 = vld [vmem:[%s405 + $0x38] sm:$0xff]
    %s414 = scalar_lea.vmem [#allocation8], 8
    %v415 = vld [vmem:[%s414] sm:$0x1]
    %v417 = vperm.slane %v415, 0
    %v420 = vsel %vm153, %v404, 0
    %422 = vmatpush.msra.mxu0 0.0
    %423 = vmatpush.msra.mxu0 0.0
    %424 = vmatpush.msra.mxu0 0.0
    %425 = vmatpush.msra.mxu0 0.0
    %426 = vmatpush.msra.mxu0 0.0
    %427 = vmatpush.msra.mxu0 0.0
    %428 = vmatpush.msra.mxu0 0.0
    %429 = vmatpush.msra.mxu0 0.0
    %430 = vmatpush.msra.mxu0 %v413
    %431 = vmatpush.msra.mxu0 %v412
    %432 = vmatpush.msra.mxu0 %v411
    %433 = vmatpush.msra.mxu0 %v410
    %434 = vmatpush.msra.mxu0 %v409
    %435 = vmatpush.msra.mxu0 %v408
    %436 = vmatpush.msra.mxu0 %v407
    %437 = vmatpush.msra.mxu0 %v406
    %438 = vmatmul.f32.gmra.mxu0 %v420
    %v439 = vpop.f32.mrf.mxu0
    %v440 = vadd.f32 %v417, %v439
    %441 = vdwg.mxu0
    %vm442 = vcmp.gt.f32.partialorder %v440, 0.0
    %v443 = vmin.f32 %v440, 0.0
    %v444 = vmul.f32 %v443, 1.442695
    %v445 = vpow.pop %v444
    %v446 = vsub.f32 %v445, 1.0
    %v447 = vsel %vm442, %v440, %v446
    %s448 = scalar_lea.vmem [#allocation7], 320
    %v449 = vld [vmem:[%s448] sm:$0xff]
    %v450 = vld [vmem:[%s448 + $0x8] sm:$0xff]
    %v451 = vld [vmem:[%s448 + $0x10] sm:$0xff]
    %v452 = vld [vmem:[%s448 + $0x18] sm:$0xff]
    %v453 = vld [vmem:[%s448 + $0x20] sm:$0xff]
    %v454 = vld [vmem:[%s448 + $0x28] sm:$0xff]
    %v455 = vld [vmem:[%s448 + $0x30] sm:$0xff]
    %v456 = vld [vmem:[%s448 + $0x38] sm:$0xff]
    %s457 = scalar_lea.vmem [#allocation8], 9
    %v458 = vld [vmem:[%s457] sm:$0x1]
    %v460 = vperm.slane %v458, 0
    %v463 = vsel %vm153, %v447, 0
    %465 = vmatpush.msra.mxu0 0.0
    %466 = vmatpush.msra.mxu0 0.0
    %467 = vmatpush.msra.mxu0 0.0
    %468 = vmatpush.msra.mxu0 0.0
    %469 = vmatpush.msra.mxu0 0.0
    %470 = vmatpush.msra.mxu0 0.0
    %471 = vmatpush.msra.mxu0 0.0
    %472 = vmatpush.msra.mxu0 0.0
    %473 = vmatpush.msra.mxu0 %v456
    %474 = vmatpush.msra.mxu0 %v455
    %475 = vmatpush.msra.mxu0 %v454
    %476 = vmatpush.msra.mxu0 %v453
    %477 = vmatpush.msra.mxu0 %v452
    %478 = vmatpush.msra.mxu0 %v451
    %479 = vmatpush.msra.mxu0 %v450
    %480 = vmatpush.msra.mxu0 %v449
    %481 = vmatmul.f32.gmra.mxu0 %v463
    %v482 = vpop.f32.mrf.mxu0
    %v483 = vadd.f32 %v460, %v482
    %484 = vdwg.mxu0
    %v485 = vsel %vm153, %v483, 0.0
    %v486 = vrot.slane %v485, 4
    %v487 = vadd.f32 %v485, %v486
    %v488 = vrot.slane %v487, 2
    %v489 = vadd.f32 %v487, %v488
    %v490 = vrot.slane %v489, 1
    %v491 = vadd.f32 %v489, %v490
    %v492 = vmul.f32 %v491, %v233
    %v493 = vsub.f32 %v483, %v492
    %v494 = vmul.f32 %v493, %v493
    %v495 = vsel %vm153, %v494, 0.0
    %v496 = vrot.slane %v495, 4
    %v497 = vadd.f32 %v495, %v496
    %v498 = vrot.slane %v497, 2
    %v499 = vadd.f32 %v497, %v498
    %v500 = vrot.slane %v499, 1
    %v501 = vadd.f32 %v499, %v500
    %v502 = vmul.f32 %v501, %v233
    %v503 = vadd.f32 %v502, 1e-05
    %v504 = vrsqrt.pop %v503
    %v505 = vmul.f32 %v504, %v503
    %v506 = vmul.f32 %v505, %v504
    %v507 = vmul.f32 0.5, %v506
    %v508 = vsub.f32 1.5, %v507
    %v509 = vmul.f32 %v504, %v508
    %vm510 = vweird.f32 %v503
    %vm511 = vweird.f32 %v504
    %vm512 = vmor %vm510, %vm511
    %v513 = vsel %vm512, %v504, %v509
    %v514 = vmul.f32 %v493, %v513
    %s515 = scalar_lea.vmem [#allocation8], 10
    %v516 = vld [vmem:[%s515] sm:$0x1]
    %v518 = vperm.slane %v516, 0
    %v520 = vmul.f32 %v514, %v518
    %s521 = scalar_lea.vmem [#allocation8], 11
    %v522 = vld [vmem:[%s521] sm:$0x1]
    %v524 = vperm.slane %v522, 0
    %v526 = vadd.f32 %v520, %v524
    %vm527 = vcmp.gt.f32.partialorder %v526, 0.0
    %v528 = vmin.f32 %v526, 0.0
    %v529 = vmul.f32 %v528, 1.442695
    %v530 = vpow.pop %v529
    %v531 = vsub.f32 %v530, 1.0
    %v532 = vsel %vm527, %v526, %v531
    %v533 = vadd.f32 %v404, %v532
    %s534 = scalar_lea.vmem [#allocation7], 384
    %v535 = vld [vmem:[%s534] sm:$0xff]
    %v536 = vld [vmem:[%s534 + $0x8] sm:$0xff]
    %v537 = vld [vmem:[%s534 + $0x10] sm:$0xff]
    %v538 = vld [vmem:[%s534 + $0x18] sm:$0xff]
    %v539 = vld [vmem:[%s534 + $0x20] sm:$0xff]
    %v540 = vld [vmem:[%s534 + $0x28] sm:$0xff]
    %v541 = vld [vmem:[%s534 + $0x30] sm:$0xff]
    %v542 = vld [vmem:[%s534 + $0x38] sm:$0xff]
    %s543 = scalar_lea.vmem [#allocation8], 12
    %v544 = vld [vmem:[%s543] sm:$0x1]
    %v546 = vperm.slane %v544, 0
    %v549 = vsel %vm153, %v533, 0
    %551 = vmatpush.msra.mxu0 0.0
    %552 = vmatpush.msra.mxu0 0.0
    %553 = vmatpush.msra.mxu0 0.0
    %554 = vmatpush.msra.mxu0 0.0
    %555 = vmatpush.msra.mxu0 0.0
    %556 = vmatpush.msra.mxu0 0.0
    %557 = vmatpush.msra.mxu0 0.0
    %558 = vmatpush.msra.mxu0 0.0
    %559 = vmatpush.msra.mxu0 %v542
    %560 = vmatpush.msra.mxu0 %v541
    %561 = vmatpush.msra.mxu0 %v540
    %562 = vmatpush.msra.mxu0 %v539
    %563 = vmatpush.msra.mxu0 %v538
    %564 = vmatpush.msra.mxu0 %v537
    %565 = vmatpush.msra.mxu0 %v536
    %566 = vmatpush.msra.mxu0 %v535
    %567 = vmatmul.f32.gmra.mxu0 %v549
    %v568 = vpop.f32.mrf.mxu0
    %v569 = vadd.f32 %v546, %v568
    %570 = vdwg.mxu0
    %vm571 = vcmp.gt.f32.partialorder %v569, 0.0
    %v572 = vmin.f32 %v569, 0.0
    %v573 = vmul.f32 %v572, 1.442695
    %v574 = vpow.pop %v573
    %v575 = vsub.f32 %v574, 1.0
    %v576 = vsel %vm571, %v569, %v575
    %s577 = scalar_lea.vmem [#allocation7], 448
    %v578 = vld [vmem:[%s577] sm:$0xff]
    %v579 = vld [vmem:[%s577 + $0x8] sm:$0xff]
    %v580 = vld [vmem:[%s577 + $0x10] sm:$0xff]
    %v581 = vld [vmem:[%s577 + $0x18] sm:$0xff]
    %v582 = vld [vmem:[%s577 + $0x20] sm:$0xff]
    %v583 = vld [vmem:[%s577 + $0x28] sm:$0xff]
    %v584 = vld [vmem:[%s577 + $0x30] sm:$0xff]
    %v585 = vld [vmem:[%s577 + $0x38] sm:$0xff]
    %s586 = scalar_lea.vmem [#allocation8], 13
    %v587 = vld [vmem:[%s586] sm:$0x1]
    %v589 = vperm.slane %v587, 0
    %v592 = vsel %vm153, %v576, 0
    %594 = vmatpush.msra.mxu0 0.0
    %595 = vmatpush.msra.mxu0 0.0
    %596 = vmatpush.msra.mxu0 0.0
    %597 = vmatpush.msra.mxu0 0.0
    %598 = vmatpush.msra.mxu0 0.0
    %599 = vmatpush.msra.mxu0 0.0
    %600 = vmatpush.msra.mxu0 0.0
    %601 = vmatpush.msra.mxu0 0.0
    %602 = vmatpush.msra.mxu0 %v585
    %603 = vmatpush.msra.mxu0 %v584
    %604 = vmatpush.msra.mxu0 %v583
    %605 = vmatpush.msra.mxu0 %v582
    %606 = vmatpush.msra.mxu0 %v581
    %607 = vmatpush.msra.mxu0 %v580
    %608 = vmatpush.msra.mxu0 %v579
    %609 = vmatpush.msra.mxu0 %v578
    %610 = vmatmul.f32.gmra.mxu0 %v592
    %v611 = vpop.f32.mrf.mxu0
    %v612 = vadd.f32 %v589, %v611
    %613 = vdwg.mxu0
    %v614 = vsel %vm153, %v612, 0.0
    %v615 = vrot.slane %v614, 4
    %v616 = vadd.f32 %v614, %v615
    %v617 = vrot.slane %v616, 2
    %v618 = vadd.f32 %v616, %v617
    %v619 = vrot.slane %v618, 1
    %v620 = vadd.f32 %v618, %v619
    %v621 = vmul.f32 %v620, %v233
    %v622 = vsub.f32 %v612, %v621
    %v623 = vmul.f32 %v622, %v622
    %v624 = vsel %vm153, %v623, 0.0
    %v625 = vrot.slane %v624, 4
    %v626 = vadd.f32 %v624, %v625
    %v627 = vrot.slane %v626, 2
    %v628 = vadd.f32 %v626, %v627
    %v629 = vrot.slane %v628, 1
    %v630 = vadd.f32 %v628, %v629
    %v631 = vmul.f32 %v630, %v233
    %v632 = vadd.f32 %v631, 1e-05
    %v633 = vrsqrt.pop %v632
    %v634 = vmul.f32 %v633, %v632
    %v635 = vmul.f32 %v634, %v633
    %v636 = vmul.f32 0.5, %v635
    %v637 = vsub.f32 1.5, %v636
    %v638 = vmul.f32 %v633, %v637
    %vm639 = vweird.f32 %v632
    %vm640 = vweird.f32 %v633
    %vm641 = vmor %vm639, %vm640
    %v642 = vsel %vm641, %v633, %v638
    %v643 = vmul.f32 %v622, %v642
    %s644 = scalar_lea.vmem [#allocation8], 14
    %v645 = vld [vmem:[%s644] sm:$0x1]
    %v647 = vperm.slane %v645, 0
    %v649 = vmul.f32 %v643, %v647
    %s650 = scalar_lea.vmem [#allocation8], 15
    %v651 = vld [vmem:[%s650] sm:$0x1]
    %v653 = vperm.slane %v651, 0
    %v655 = vadd.f32 %v649, %v653
    %vm656 = vcmp.gt.f32.partialorder %v655, 0.0
    %v657 = vmin.f32 %v655, 0.0
    %v658 = vmul.f32 %v657, 1.442695
    %v659 = vpow.pop %v658
    %v660 = vsub.f32 %v659, 1.0
    %v661 = vsel %vm656, %v655, %v660
    %v662 = vadd.f32 %v533, %v661
    %s663 = scalar_lea.vmem [#allocation7], 512
    %v664 = vld [vmem:[%s663] sm:$0xff]
    %v665 = vld [vmem:[%s663 + $0x8] sm:$0xff]
    %v666 = vld [vmem:[%s663 + $0x10] sm:$0xff]
    %v667 = vld [vmem:[%s663 + $0x18] sm:$0xff]
    %v668 = vld [vmem:[%s663 + $0x20] sm:$0xff]
    %v669 = vld [vmem:[%s663 + $0x28] sm:$0xff]
    %v670 = vld [vmem:[%s663 + $0x30] sm:$0xff]
    %v671 = vld [vmem:[%s663 + $0x38] sm:$0xff]
    %s672 = scalar_lea.vmem [#allocation8], 16
    %v673 = vld [vmem:[%s672] sm:$0x1]
    %v675 = vperm.slane %v673, 0
    %v678 = vsel %vm153, %v662, 0
    %680 = vmatpush.msra.mxu0 0.0
    %681 = vmatpush.msra.mxu0 0.0
    %682 = vmatpush.msra.mxu0 0.0
    %683 = vmatpush.msra.mxu0 0.0
    %684 = vmatpush.msra.mxu0 0.0
    %685 = vmatpush.msra.mxu0 0.0
    %686 = vmatpush.msra.mxu0 0.0
    %687 = vmatpush.msra.mxu0 0.0
    %688 = vmatpush.msra.mxu0 %v671
    %689 = vmatpush.msra.mxu0 %v670
    %690 = vmatpush.msra.mxu0 %v669
    %691 = vmatpush.msra.mxu0 %v668
    %692 = vmatpush.msra.mxu0 %v667
    %693 = vmatpush.msra.mxu0 %v666
    %694 = vmatpush.msra.mxu0 %v665
    %695 = vmatpush.msra.mxu0 %v664
    %696 = vmatmul.f32.gmra.mxu0 %v678
    %v697 = vpop.f32.mrf.mxu0
    %v698 = vadd.f32 %v675, %v697
    %699 = vdwg.mxu0
    %vm700 = vcmp.gt.f32.partialorder %v698, 0.0
    %v701 = vmin.f32 %v698, 0.0
    %v702 = vmul.f32 %v701, 1.442695
    %v703 = vpow.pop %v702
    %v704 = vsub.f32 %v703, 1.0
    %v705 = vsel %vm700, %v698, %v704
    %s706 = scalar_lea.vmem [#allocation7], 576
    %v707 = vld [vmem:[%s706] sm:$0xff]
    %v708 = vld [vmem:[%s706 + $0x8] sm:$0xff]
    %v709 = vld [vmem:[%s706 + $0x10] sm:$0xff]
    %v710 = vld [vmem:[%s706 + $0x18] sm:$0xff]
    %v711 = vld [vmem:[%s706 + $0x20] sm:$0xff]
    %v712 = vld [vmem:[%s706 + $0x28] sm:$0xff]
    %v713 = vld [vmem:[%s706 + $0x30] sm:$0xff]
    %v714 = vld [vmem:[%s706 + $0x38] sm:$0xff]
    %s715 = scalar_lea.vmem [#allocation8], 17
    %v716 = vld [vmem:[%s715] sm:$0x1]
    %v718 = vperm.slane %v716, 0
    %v721 = vsel %vm153, %v705, 0
    %723 = vmatpush.msra.mxu0 0.0
    %724 = vmatpush.msra.mxu0 0.0
    %725 = vmatpush.msra.mxu0 0.0
    %726 = vmatpush.msra.mxu0 0.0
    %727 = vmatpush.msra.mxu0 0.0
    %728 = vmatpush.msra.mxu0 0.0
    %729 = vmatpush.msra.mxu0 0.0
    %730 = vmatpush.msra.mxu0 0.0
    %731 = vmatpush.msra.mxu0 %v714
    %732 = vmatpush.msra.mxu0 %v713
    %733 = vmatpush.msra.mxu0 %v712
    %734 = vmatpush.msra.mxu0 %v711
    %735 = vmatpush.msra.mxu0 %v710
    %736 = vmatpush.msra.mxu0 %v709
    %737 = vmatpush.msra.mxu0 %v708
    %738 = vmatpush.msra.mxu0 %v707
    %739 = vmatmul.f32.gmra.mxu0 %v721
    %v740 = vpop.f32.mrf.mxu0
    %v741 = vadd.f32 %v718, %v740
    %742 = vdwg.mxu0
    %v743 = vsel %vm153, %v741, 0.0
    %v744 = vrot.slane %v743, 4
    %v745 = vadd.f32 %v743, %v744
    %v746 = vrot.slane %v745, 2
    %v747 = vadd.f32 %v745, %v746
    %v748 = vrot.slane %v747, 1
    %v749 = vadd.f32 %v747, %v748
    %v750 = vmul.f32 %v749, %v233
    %v751 = vsub.f32 %v741, %v750
    %v752 = vmul.f32 %v751, %v751
    %v753 = vsel %vm153, %v752, 0.0
    %v754 = vrot.slane %v753, 4
    %v755 = vadd.f32 %v753, %v754
    %v756 = vrot.slane %v755, 2
    %v757 = vadd.f32 %v755, %v756
    %v758 = vrot.slane %v757, 1
    %v759 = vadd.f32 %v757, %v758
    %v760 = vmul.f32 %v759, %v233
    %v761 = vadd.f32 %v760, 1e-05
    %v762 = vrsqrt.pop %v761
    %v763 = vmul.f32 %v762, %v761
    %v764 = vmul.f32 %v763, %v762
    %v765 = vmul.f32 0.5, %v764
    %v766 = vsub.f32 1.5, %v765
    %v767 = vmul.f32 %v762, %v766
    %vm768 = vweird.f32 %v761
    %vm769 = vweird.f32 %v762
    %vm770 = vmor %vm768, %vm769
    %v771 = vsel %vm770, %v762, %v767
    %v772 = vmul.f32 %v751, %v771
    %s773 = scalar_lea.vmem [#allocation8], 18
    %v774 = vld [vmem:[%s773] sm:$0x1]
    %v776 = vperm.slane %v774, 0
    %v778 = vmul.f32 %v772, %v776
    %s779 = scalar_lea.vmem [#allocation8], 19
    %v780 = vld [vmem:[%s779] sm:$0x1]
    %v782 = vperm.slane %v780, 0
    %v784 = vadd.f32 %v778, %v782
    %vm785 = vcmp.gt.f32.partialorder %v784, 0.0
    %v786 = vmin.f32 %v784, 0.0
    %v787 = vmul.f32 %v786, 1.442695
    %v788 = vpow.pop %v787
    %v789 = vsub.f32 %v788, 1.0
    %v790 = vsel %vm785, %v784, %v789
    %v791 = vadd.f32 %v662, %v790
    %v792 = vld [vmem:[#allocation10] sm:$0xff]
    %v793 = vld [vmem:[#allocation10 + $0x8] sm:$0xff]
    %v794 = vld [vmem:[#allocation10 + $0x10] sm:$0xff]
    %v795 = vld [vmem:[#allocation10 + $0x18] sm:$0xff]
    %v796 = vld [vmem:[#allocation10 + $0x20] sm:$0xff]
    %v797 = vld [vmem:[#allocation10 + $0x28] sm:$0xff]
    %v798 = vld [vmem:[#allocation10 + $0x30] sm:$0xff]
    %v799 = vld [vmem:[#allocation10 + $0x38] sm:$0xff]
    %v800 = vld [vmem:[%s6] sm:$0x1]
    %v802 = vperm.slane %v800, 0
    %v805 = vsel %vm153, %v791, 0
    %807 = vmatpush.msra.mxu0 0.0
    %808 = vmatpush.msra.mxu0 0.0
    %809 = vmatpush.msra.mxu0 0.0
    %810 = vmatpush.msra.mxu0 0.0
    %811 = vmatpush.msra.mxu0 0.0
    %812 = vmatpush.msra.mxu0 0.0
    %813 = vmatpush.msra.mxu0 0.0
    %814 = vmatpush.msra.mxu0 0.0
    %815 = vmatpush.msra.mxu0 %v799
    %816 = vmatpush.msra.mxu0 %v798
    %817 = vmatpush.msra.mxu0 %v797
    %818 = vmatpush.msra.mxu0 %v796
    %819 = vmatpush.msra.mxu0 %v795
    %820 = vmatpush.msra.mxu0 %v794
    %821 = vmatpush.msra.mxu0 %v793
    %822 = vmatpush.msra.mxu0 %v792
    %823 = vmatmul.f32.gmra.mxu0 %v805
    %v824 = vpop.f32.mrf.mxu0
    %v825 = vadd.f32 %v802, %v824
    %826 = vdwg.mxu0
    %827 = vst [vmem:[#allocation11] sm:$0xff] %v825
    // Predicated region
    $region50: #{tpu_custom_call.1} parent=1 // pred_check
      _
    $region51: #{tpu_custom_call.1} parent=1 // pred_check_branch
      %829 = sbr.rel (0) target = $region53
    $region52: #{tpu_custom_call.1} parent=1 // pred_region
      %831 = vsyncadd [#allocation4], 0
      %s833 = sshll.u32 [#allocation11], 4
      %s834 = int_to_ptr.vmem [resolvable:$true] %s833
      %s835 = sshll.u32 %s7, 4
      %s836 = int_to_ptr.hbm [resolvable:$true] %s835
      %838 = dma.vmem_to_hbm [thread:$0]  %s834, 128, %s836, [#allocation4]
    $region53: #{tpu_custom_call.1} parent=1 // pred_fallthru
      _
    // Predicated region
    $region54: #{tpu_custom_call.1} parent=1 // pred_check
      _
    $region55: #{tpu_custom_call.1} parent=1 // pred_check_branch
      %840 = sbr.rel (0) target = $region57
    $region56: #{tpu_custom_call.1} parent=1 // pred_region
      %842 = dma.done [#allocation4], 128
    $region57: #{tpu_custom_call.1} parent=1 // pred_fallthru
      _
    %843 = vsyncpa [#allocation3], 1
    %844 = vsyncpa [#allocation6], 1
    %845 = vsyncpa [#allocation9], 1
    %846 = vsyncpa [#allocation4], 1

</llo_original>
